<compile_context>
chip_gen: v7x
topology: tpu7x:2x2x1
jax: 0.10.0
libtpu: 0.0.40
codegen_flags: <defaults>
</compile_context>

<pallas_src>
import math
import functools

import jax
import jax.numpy as jnp
from jax.experimental import pallas as pl
from jax.experimental.pallas import tpu as pltpu


# ---------------- config (small, BERT-like) ----------------
BATCH = 2
SEQ = 8
HIDDEN = 32
NUM_HEADS = 4
HEAD_DIM = HIDDEN // NUM_HEADS


def bert_self_attention_kernel(h_ref, mask_ref, wqkv_ref, bqkv_ref, out_ref,
                               *, batch, seq, hidden, num_heads, head_dim):
    # (B, S, H) -> (B*S, H): merge of leading dims only (layout-free).
    x = h_ref[...].reshape(batch * seq, hidden)

    # Fused Q|K|V projection. The 1/sqrt(head_dim) scale is already folded
    # into the Q columns of wqkv / bqkv on the host.
    qkv = jnp.dot(x, wqkv_ref[...],
                  preferred_element_type=jnp.float32) + bqkv_ref[...]   # (B*S, 3H)

    mask = mask_ref[...]                                   # (B, 1, S) additive mask

    for h in range(num_heads):                             # static, tiny loop
        lo = h * head_dim
        hi = (h + 1) * head_dim
        q_h = qkv[:, lo:hi].reshape(batch, seq, head_dim)                       # (B,S,D)
        k_h = qkv[:, hidden + lo:hidden + hi].reshape(batch, seq, head_dim)     # (B,S,D)
        v_h = qkv[:, 2 * hidden + lo:2 * hidden + hi].reshape(batch, seq, head_dim)

        # Batched over B: scores, stable softmax, weighted sum of values.
        s = jnp.einsum('bqd,bkd->bqk', q_h, k_h,
                       preferred_element_type=jnp.float32)                      # (B,S,S)
        s = s + mask                                          # broadcast over query dim
        s = s - jnp.max(s, axis=-1, keepdims=True)
        p = jnp.exp(s)
        denom = jnp.sum(p, axis=-1, keepdims=True)            # (B,S,1)
        p = p * (1.0 / denom)                                  # dropout = identity (eval)
        ctx_h = jnp.einsum('bqk,bkd->bqd', p.astype(v_h.dtype), v_h,
                           preferred_element_type=jnp.float32)                  # (B,S,D)

        # Store this head's context directly at its lane offset (no concat).
        out_ref[:, :, lo:hi] = ctx_h.astype(out_ref.dtype)


def _full_spec(shape):
    nd = len(shape)
    return pl.BlockSpec(shape, lambda i, _nd=nd: (0,) * _nd)


def bert_self_attention_pallas(hidden, attn_mask, params, *, num_heads=NUM_HEADS):
    """hidden: (B,S,H) f32; attn_mask: (B,1,S) additive; params: dict of
    pre-transposed [in,out] weights wq/wk/wv (H,H) and biases bq/bk/bv (1,H)."""
    B, S, H = hidden.shape
    hd = H // num_heads
    scale = 1.0 / math.sqrt(hd)

    # Host-side, one-time parameter transform: fold the softmax scale into the
    # query projection and pack Q|K|V into single weight / bias slabs.
    wqkv = jnp.concatenate(
        [params["wq"] * scale, params["wk"], params["wv"]], axis=1)   # (H, 3H)
    bqkv = jnp.concatenate(
        [params["bq"] * scale, params["bk"], params["bv"]], axis=1)   # (1, 3H)

    kernel = functools.partial(bert_self_attention_kernel,
                               batch=B, seq=S, hidden=H,
                               num_heads=num_heads, head_dim=hd)

    return pl.pallas_call(
        kernel,
        out_shape=jax.ShapeDtypeStruct((B, S, H), hidden.dtype),
        grid=(1,),
        in_specs=[
            _full_spec((B, S, H)),       # hidden states
            _full_spec((B, 1, S)),       # additive attention mask
            _full_spec((H, 3 * H)),      # fused Q|K|V weights (Q pre-scaled)
            _full_spec((1, 3 * H)),      # fused Q|K|V biases  (Q pre-scaled)
        ],
        out_specs=_full_spec((B, S, H)),
        compiler_params=pltpu.CompilerParams(
            dimension_semantics=("arbitrary",),
            vmem_limit_bytes=16 * 1024 * 1024),
    )(hidden, attn_mask, wqkv, bqkv)


# ---------------- pure-JAX reference (mirrors the PyTorch module) ----------------
def bert_self_attention_ref(x, mask, params, *, num_heads=NUM_HEADS):
    B, S, H = x.shape
    hd = H // num_heads
    q = x @ params["wq"] + params["bq"]
    k = x @ params["wk"] + params["bk"]
    v = x @ params["wv"] + params["bv"]

    def split(t):
        return t.reshape(B, S, num_heads, hd).transpose(0, 2, 1, 3)

    qh, kh, vh = split(q), split(k), split(v)
    scores = jnp.einsum("bhqd,bhkd->bhqk", qh, kh) / math.sqrt(hd)
    scores = scores + mask[:, None, :, :]            # (B,1,1,S) broadcast
    probs = jax.nn.softmax(scores, axis=-1)          # dropout = identity (eval)
    ctx = jnp.einsum("bhqk,bhkd->bhqd", probs, vh)
    return ctx.transpose(0, 2, 1, 3).reshape(B, S, H)


if __name__ == "__main__":
    root = jax.random.PRNGKey(0)
    k_h, k_m, k_p = jax.random.split(root, 3)

    hidden = jax.random.normal(k_h, (BATCH, SEQ, HIDDEN), jnp.float32)

    # additive attention mask: 0 for visible tokens, -10000 for padded ones
    pad = jax.random.bernoulli(k_m, 0.25, (BATCH, SEQ))
    attn_mask = jnp.where(pad, -10000.0, 0.0).astype(jnp.float32)[:, None, :]  # (B,1,S)

    ks = jax.random.split(k_p, 6)
    s0 = 0.05
    params = {
        "wq": s0 * jax.random.normal(ks[0], (HIDDEN, HIDDEN), jnp.float32),
        "bq": s0 * jax.random.normal(ks[1], (1, HIDDEN), jnp.float32),
        "wk": s0 * jax.random.normal(ks[2], (HIDDEN, HIDDEN), jnp.float32),
        "bk": s0 * jax.random.normal(ks[3], (1, HIDDEN), jnp.float32),
        "wv": s0 * jax.random.normal(ks[4], (HIDDEN, HIDDEN), jnp.float32),
        "bv": s0 * jax.random.normal(ks[5], (1, HIDDEN), jnp.float32),
    }

    out = bert_self_attention_pallas(hidden, attn_mask, params)
    out = jax.block_until_ready(out)

    ref = bert_self_attention_ref(hidden, attn_mask, params)
    err = jnp.max(jnp.abs(out - ref))
    assert jnp.allclose(out, ref, rtol=1e-4, atol=1e-4), f"max abs err = {err}"

    print("KERNEL_OK")
</pallas_src>

<mosaic_0001>
module attributes {stable_mosaic.version = 11 : i64} {
  func.func @bert_self_attention_kernel(%arg0: i32, %arg1: memref<2x8x32xf32, #tpu.memory_space<vmem>>, %arg2: memref<2x1x8xf32, #tpu.memory_space<vmem>>, %arg3: memref<32x96xf32, #tpu.memory_space<vmem>>, %arg4: memref<1x96xf32, #tpu.memory_space<vmem>>, %arg5: memref<2x8x32xf32, #tpu.memory_space<vmem>>) attributes {dimension_semantics = [#tpu.dimension_semantics<arbitrary>], iteration_bounds = array<i64: 1>, scalar_prefetch = 0 : i64, scratch_operands = 0 : i64, tpu.core_type = #tpu.core_type<tc>, window_params = [{pipeline_mode = #tpu.pipeline_mode<synchronous>, transform_indices = @transform_0, window_bounds = array<i64: 2, 8, 32>}, {pipeline_mode = #tpu.pipeline_mode<synchronous>, transform_indices = @transform_1, window_bounds = array<i64: 2, 1, 8>}, {pipeline_mode = #tpu.pipeline_mode<synchronous>, transform_indices = @transform_2, window_bounds = array<i64: 32, 96>}, {pipeline_mode = #tpu.pipeline_mode<synchronous>, transform_indices = @transform_3, window_bounds = array<i64: 1, 96>}, {pipeline_mode = #tpu.pipeline_mode<synchronous>, transform_indices = @transform_4, window_bounds = array<i64: 2, 8, 32>}]} {
    %c0 = arith.constant 0 : index
    %c0_0 = arith.constant 0 : index
    %c0_1 = arith.constant 0 : index
    %0 = vector.load %arg1[%c0, %c0_0, %c0_1] : memref<2x8x32xf32, #tpu.memory_space<vmem>>, vector<2x8x32xf32>
    %1 = vector.shape_cast %0 : vector<2x8x32xf32> to vector<16x32xf32>
    %c0_2 = arith.constant 0 : index
    %c0_3 = arith.constant 0 : index
    %2 = vector.load %arg3[%c0_2, %c0_3] : memref<32x96xf32, #tpu.memory_space<vmem>>, vector<32x96xf32>
    %cst = arith.constant dense<0.000000e+00> : vector<16x96xf32>
    %3 = tpu.matmul %1, %2, %cst {dimension_numbers = #tpu.dot_dimension_numbers<[1], [0], [0], [1], [0, 0, 1, 1], [], []>} : vector<16x32xf32>, vector<32x96xf32>, vector<16x96xf32> -> vector<16x96xf32>
    %c0_4 = arith.constant 0 : index
    %c0_5 = arith.constant 0 : index
    %4 = vector.load %arg4[%c0_4, %c0_5] : memref<1x96xf32, #tpu.memory_space<vmem>>, vector<1x96xf32>
    %5 = vector.broadcast %4 : vector<1x96xf32> to vector<16x96xf32>
    %6 = arith.addf %3, %5 : vector<16x96xf32>
    %c0_6 = arith.constant 0 : index
    %c0_7 = arith.constant 0 : index
    %c0_8 = arith.constant 0 : index
    %7 = vector.load %arg2[%c0_6, %c0_7, %c0_8] : memref<2x1x8xf32, #tpu.memory_space<vmem>>, vector<2x1x8xf32>
    %8 = vector.extract_strided_slice %6 {offsets = [0, 0], sizes = [16, 8], strides = [1, 1]} : vector<16x96xf32> to vector<16x8xf32>
    %9 = vector.shape_cast %8 : vector<16x8xf32> to vector<2x8x8xf32>
    %10 = vector.extract_strided_slice %6 {offsets = [0, 32], sizes = [16, 8], strides = [1, 1]} : vector<16x96xf32> to vector<16x8xf32>
    %11 = vector.shape_cast %10 : vector<16x8xf32> to vector<2x8x8xf32>
    %12 = vector.extract_strided_slice %6 {offsets = [0, 64], sizes = [16, 8], strides = [1, 1]} : vector<16x96xf32> to vector<16x8xf32>
    %13 = vector.shape_cast %12 : vector<16x8xf32> to vector<2x8x8xf32>
    "tpu.trace_start"() <{level = 10 : i32, message = "bqd,bkd->bqk"}> : () -> ()
    %cst_9 = arith.constant dense<0.000000e+00> : vector<2x8x8xf32>
    %14 = tpu.matmul %9, %11, %cst_9 {dimension_numbers = #tpu.dot_dimension_numbers<[2], [2], [1], [1], [0, 0, 0, 1, 1, 1], [0], [0]>} : vector<2x8x8xf32>, vector<2x8x8xf32>, vector<2x8x8xf32> -> vector<2x8x8xf32>
    "tpu.trace_stop"() : () -> ()
    %15 = vector.broadcast %7 : vector<2x1x8xf32> to vector<2x8x8xf32>
    %16 = arith.addf %14, %15 : vector<2x8x8xf32>
    %cst_10 = arith.constant dense<0xFF800000> : vector<2x8xf32>
    %17 = vector.multi_reduction <maximumf>, %16, %cst_10 [2] : vector<2x8x8xf32> to vector<2x8xf32>
    %18 = vector.shape_cast %17 : vector<2x8xf32> to vector<2x8x1xf32>
    %19 = vector.broadcast %18 : vector<2x8x1xf32> to vector<2x8x8xf32>
    %20 = arith.subf %16, %19 : vector<2x8x8xf32>
    %21 = math.exp %20 : vector<2x8x8xf32>
    %cst_11 = arith.constant dense<0.000000e+00> : vector<2x8xf32>
    %22 = vector.multi_reduction <add>, %21, %cst_11 [2] : vector<2x8x8xf32> to vector<2x8xf32>
    %23 = vector.shape_cast %22 : vector<2x8xf32> to vector<2x8x1xf32>
    %cst_12 = arith.constant 1.000000e+00 : f32
    %24 = vector.broadcast %cst_12 : f32 to vector<2x8x1xf32>
    %25 = arith.divf %24, %23 : vector<2x8x1xf32>
    %26 = vector.broadcast %25 : vector<2x8x1xf32> to vector<2x8x8xf32>
    %27 = arith.mulf %21, %26 : vector<2x8x8xf32>
    "tpu.trace_start"() <{level = 10 : i32, message = "bqk,bkd->bqd"}> : () -> ()
    %cst_13 = arith.constant dense<0.000000e+00> : vector<2x8x8xf32>
    %28 = tpu.matmul %27, %13, %cst_13 {dimension_numbers = #tpu.dot_dimension_numbers<[2], [1], [1], [2], [0, 0, 0, 1, 1, 2], [0], [0]>} : vector<2x8x8xf32>, vector<2x8x8xf32>, vector<2x8x8xf32> -> vector<2x8x8xf32>
    "tpu.trace_stop"() : () -> ()
    %c0_14 = arith.constant 0 : index
    %c0_15 = arith.constant 0 : index
    %c0_16 = arith.constant 0 : index
    %29 = vector.load %arg5[%c0_14, %c0_15, %c0_16] : memref<2x8x32xf32, #tpu.memory_space<vmem>>, vector<2x8x8xf32>
    tpu.vector_store %arg5[%c0_14, %c0_15, %c0_16], %28 {strides = array<i32>} : memref<2x8x32xf32, #tpu.memory_space<vmem>>, vector<2x8x8xf32>,
    %30 = vector.extract_strided_slice %6 {offsets = [0, 8], sizes = [16, 8], strides = [1, 1]} : vector<16x96xf32> to vector<16x8xf32>
    %31 = vector.shape_cast %30 : vector<16x8xf32> to vector<2x8x8xf32>
    %32 = vector.extract_strided_slice %6 {offsets = [0, 40], sizes = [16, 8], strides = [1, 1]} : vector<16x96xf32> to vector<16x8xf32>
    %33 = vector.shape_cast %32 : vector<16x8xf32> to vector<2x8x8xf32>
    %34 = vector.extract_strided_slice %6 {offsets = [0, 72], sizes = [16, 8], strides = [1, 1]} : vector<16x96xf32> to vector<16x8xf32>
    %35 = vector.shape_cast %34 : vector<16x8xf32> to vector<2x8x8xf32>
    "tpu.trace_start"() <{level = 10 : i32, message = "bqd,bkd->bqk"}> : () -> ()
    %cst_17 = arith.constant dense<0.000000e+00> : vector<2x8x8xf32>
    %36 = tpu.matmul %31, %33, %cst_17 {dimension_numbers = #tpu.dot_dimension_numbers<[2], [2], [1], [1], [0, 0, 0, 1, 1, 1], [0], [0]>} : vector<2x8x8xf32>, vector<2x8x8xf32>, vector<2x8x8xf32> -> vector<2x8x8xf32>
    "tpu.trace_stop"() : () -> ()
    %37 = vector.broadcast %7 : vector<2x1x8xf32> to vector<2x8x8xf32>
    %38 = arith.addf %36, %37 : vector<2x8x8xf32>
    %cst_18 = arith.constant dense<0xFF800000> : vector<2x8xf32>
    %39 = vector.multi_reduction <maximumf>, %38, %cst_18 [2] : vector<2x8x8xf32> to vector<2x8xf32>
    %40 = vector.shape_cast %39 : vector<2x8xf32> to vector<2x8x1xf32>
    %41 = vector.broadcast %40 : vector<2x8x1xf32> to vector<2x8x8xf32>
    %42 = arith.subf %38, %41 : vector<2x8x8xf32>
    %43 = math.exp %42 : vector<2x8x8xf32>
    %cst_19 = arith.constant dense<0.000000e+00> : vector<2x8xf32>
    %44 = vector.multi_reduction <add>, %43, %cst_19 [2] : vector<2x8x8xf32> to vector<2x8xf32>
    %45 = vector.shape_cast %44 : vector<2x8xf32> to vector<2x8x1xf32>
    %cst_20 = arith.constant 1.000000e+00 : f32
    %46 = vector.broadcast %cst_20 : f32 to vector<2x8x1xf32>
    %47 = arith.divf %46, %45 : vector<2x8x1xf32>
    %48 = vector.broadcast %47 : vector<2x8x1xf32> to vector<2x8x8xf32>
    %49 = arith.mulf %43, %48 : vector<2x8x8xf32>
    "tpu.trace_start"() <{level = 10 : i32, message = "bqk,bkd->bqd"}> : () -> ()
    %cst_21 = arith.constant dense<0.000000e+00> : vector<2x8x8xf32>
    %50 = tpu.matmul %49, %35, %cst_21 {dimension_numbers = #tpu.dot_dimension_numbers<[2], [1], [1], [2], [0, 0, 0, 1, 1, 2], [0], [0]>} : vector<2x8x8xf32>, vector<2x8x8xf32>, vector<2x8x8xf32> -> vector<2x8x8xf32>
    "tpu.trace_stop"() : () -> ()
    %c0_22 = arith.constant 0 : index
    %c0_23 = arith.constant 0 : index
    %c8 = arith.constant 8 : index
    %51 = vector.load %arg5[%c0_22, %c0_23, %c8] : memref<2x8x32xf32, #tpu.memory_space<vmem>>, vector<2x8x8xf32>
    tpu.vector_store %arg5[%c0_22, %c0_23, %c8], %50 {strides = array<i32>} : memref<2x8x32xf32, #tpu.memory_space<vmem>>, vector<2x8x8xf32>,
    %52 = vector.extract_strided_slice %6 {offsets = [0, 16], sizes = [16, 8], strides = [1, 1]} : vector<16x96xf32> to vector<16x8xf32>
    %53 = vector.shape_cast %52 : vector<16x8xf32> to vector<2x8x8xf32>
    %54 = vector.extract_strided_slice %6 {offsets = [0, 48], sizes = [16, 8], strides = [1, 1]} : vector<16x96xf32> to vector<16x8xf32>
    %55 = vector.shape_cast %54 : vector<16x8xf32> to vector<2x8x8xf32>
    %56 = vector.extract_strided_slice %6 {offsets = [0, 80], sizes = [16, 8], strides = [1, 1]} : vector<16x96xf32> to vector<16x8xf32>
    %57 = vector.shape_cast %56 : vector<16x8xf32> to vector<2x8x8xf32>
    "tpu.trace_start"() <{level = 10 : i32, message = "bqd,bkd->bqk"}> : () -> ()
    %cst_24 = arith.constant dense<0.000000e+00> : vector<2x8x8xf32>
    %58 = tpu.matmul %53, %55, %cst_24 {dimension_numbers = #tpu.dot_dimension_numbers<[2], [2], [1], [1], [0, 0, 0, 1, 1, 1], [0], [0]>} : vector<2x8x8xf32>, vector<2x8x8xf32>, vector<2x8x8xf32> -> vector<2x8x8xf32>
    "tpu.trace_stop"() : () -> ()
    %59 = vector.broadcast %7 : vector<2x1x8xf32> to vector<2x8x8xf32>
    %60 = arith.addf %58, %59 : vector<2x8x8xf32>
    %cst_25 = arith.constant dense<0xFF800000> : vector<2x8xf32>
    %61 = vector.multi_reduction <maximumf>, %60, %cst_25 [2] : vector<2x8x8xf32> to vector<2x8xf32>
    %62 = vector.shape_cast %61 : vector<2x8xf32> to vector<2x8x1xf32>
    %63 = vector.broadcast %62 : vector<2x8x1xf32> to vector<2x8x8xf32>
    %64 = arith.subf %60, %63 : vector<2x8x8xf32>
    %65 = math.exp %64 : vector<2x8x8xf32>
    %cst_26 = arith.constant dense<0.000000e+00> : vector<2x8xf32>
    %66 = vector.multi_reduction <add>, %65, %cst_26 [2] : vector<2x8x8xf32> to vector<2x8xf32>
    %67 = vector.shape_cast %66 : vector<2x8xf32> to vector<2x8x1xf32>
    %cst_27 = arith.constant 1.000000e+00 : f32
    %68 = vector.broadcast %cst_27 : f32 to vector<2x8x1xf32>
    %69 = arith.divf %68, %67 : vector<2x8x1xf32>
    %70 = vector.broadcast %69 : vector<2x8x1xf32> to vector<2x8x8xf32>
    %71 = arith.mulf %65, %70 : vector<2x8x8xf32>
    "tpu.trace_start"() <{level = 10 : i32, message = "bqk,bkd->bqd"}> : () -> ()
    %cst_28 = arith.constant dense<0.000000e+00> : vector<2x8x8xf32>
    %72 = tpu.matmul %71, %57, %cst_28 {dimension_numbers = #tpu.dot_dimension_numbers<[2], [1], [1], [2], [0, 0, 0, 1, 1, 2], [0], [0]>} : vector<2x8x8xf32>, vector<2x8x8xf32>, vector<2x8x8xf32> -> vector<2x8x8xf32>
    "tpu.trace_stop"() : () -> ()
    %c0_29 = arith.constant 0 : index
    %c0_30 = arith.constant 0 : index
    %c16 = arith.constant 16 : index
    %73 = vector.load %arg5[%c0_29, %c0_30, %c16] : memref<2x8x32xf32, #tpu.memory_space<vmem>>, vector<2x8x8xf32>
    tpu.vector_store %arg5[%c0_29, %c0_30, %c16], %72 {strides = array<i32>} : memref<2x8x32xf32, #tpu.memory_space<vmem>>, vector<2x8x8xf32>,
    %74 = vector.extract_strided_slice %6 {offsets = [0, 24], sizes = [16, 8], strides = [1, 1]} : vector<16x96xf32> to vector<16x8xf32>
    %75 = vector.shape_cast %74 : vector<16x8xf32> to vector<2x8x8xf32>
    %76 = vector.extract_strided_slice %6 {offsets = [0, 56], sizes = [16, 8], strides = [1, 1]} : vector<16x96xf32> to vector<16x8xf32>
    %77 = vector.shape_cast %76 : vector<16x8xf32> to vector<2x8x8xf32>
    %78 = vector.extract_strided_slice %6 {offsets = [0, 88], sizes = [16, 8], strides = [1, 1]} : vector<16x96xf32> to vector<16x8xf32>
    %79 = vector.shape_cast %78 : vector<16x8xf32> to vector<2x8x8xf32>
    "tpu.trace_start"() <{level = 10 : i32, message = "bqd,bkd->bqk"}> : () -> ()
    %cst_31 = arith.constant dense<0.000000e+00> : vector<2x8x8xf32>
    %80 = tpu.matmul %75, %77, %cst_31 {dimension_numbers = #tpu.dot_dimension_numbers<[2], [2], [1], [1], [0, 0, 0, 1, 1, 1], [0], [0]>} : vector<2x8x8xf32>, vector<2x8x8xf32>, vector<2x8x8xf32> -> vector<2x8x8xf32>
    "tpu.trace_stop"() : () -> ()
    %81 = vector.broadcast %7 : vector<2x1x8xf32> to vector<2x8x8xf32>
    %82 = arith.addf %80, %81 : vector<2x8x8xf32>
    %cst_32 = arith.constant dense<0xFF800000> : vector<2x8xf32>
    %83 = vector.multi_reduction <maximumf>, %82, %cst_32 [2] : vector<2x8x8xf32> to vector<2x8xf32>
    %84 = vector.shape_cast %83 : vector<2x8xf32> to vector<2x8x1xf32>
    %85 = vector.broadcast %84 : vector<2x8x1xf32> to vector<2x8x8xf32>
    %86 = arith.subf %82, %85 : vector<2x8x8xf32>
    %87 = math.exp %86 : vector<2x8x8xf32>
    %cst_33 = arith.constant dense<0.000000e+00> : vector<2x8xf32>
    %88 = vector.multi_reduction <add>, %87, %cst_33 [2] : vector<2x8x8xf32> to vector<2x8xf32>
    %89 = vector.shape_cast %88 : vector<2x8xf32> to vector<2x8x1xf32>
    %cst_34 = arith.constant 1.000000e+00 : f32
    %90 = vector.broadcast %cst_34 : f32 to vector<2x8x1xf32>
    %91 = arith.divf %90, %89 : vector<2x8x1xf32>
    %92 = vector.broadcast %91 : vector<2x8x1xf32> to vector<2x8x8xf32>
    %93 = arith.mulf %87, %92 : vector<2x8x8xf32>
    "tpu.trace_start"() <{level = 10 : i32, message = "bqk,bkd->bqd"}> : () -> ()
    %cst_35 = arith.constant dense<0.000000e+00> : vector<2x8x8xf32>
    %94 = tpu.matmul %93, %79, %cst_35 {dimension_numbers = #tpu.dot_dimension_numbers<[2], [1], [1], [2], [0, 0, 0, 1, 1, 2], [0], [0]>} : vector<2x8x8xf32>, vector<2x8x8xf32>, vector<2x8x8xf32> -> vector<2x8x8xf32>
    "tpu.trace_stop"() : () -> ()
    %c0_36 = arith.constant 0 : index
    %c0_37 = arith.constant 0 : index
    %c24 = arith.constant 24 : index
    %95 = vector.load %arg5[%c0_36, %c0_37, %c24] : memref<2x8x32xf32, #tpu.memory_space<vmem>>, vector<2x8x8xf32>
    tpu.vector_store %arg5[%c0_36, %c0_37, %c24], %94 {strides = array<i32>} : memref<2x8x32xf32, #tpu.memory_space<vmem>>, vector<2x8x8xf32>,
    return
  }
  func.func @transform_0(%arg0: i32) -> (i32, i32, i32) {
    %c0_i32 = arith.constant 0 : i32
    %c0_i32_0 = arith.constant 0 : i32
    %c0_i32_1 = arith.constant 0 : i32
    %c0_i32_2 = arith.constant 0 : i32
    return %c0_i32, %c0_i32_0, %c0_i32_1 : i32, i32, i32
  }
  func.func @transform_1(%arg0: i32) -> (i32, i32, i32) {
    %c0_i32 = arith.constant 0 : i32
    %c0_i32_0 = arith.constant 0 : i32
    %c0_i32_1 = arith.constant 0 : i32
    %c0_i32_2 = arith.constant 0 : i32
    return %c0_i32, %c0_i32_0, %c0_i32_1 : i32, i32, i32
  }
  func.func @transform_2(%arg0: i32) -> (i32, i32) {
    %c0_i32 = arith.constant 0 : i32
    %c0_i32_0 = arith.constant 0 : i32
    %c0_i32_1 = arith.constant 0 : i32
    return %c0_i32, %c0_i32_0 : i32, i32
  }
  func.func @transform_3(%arg0: i32) -> (i32, i32) {
    %c0_i32 = arith.constant 0 : i32
    %c0_i32_0 = arith.constant 0 : i32
    %c0_i32_1 = arith.constant 0 : i32
    return %c0_i32, %c0_i32_0 : i32, i32
  }
  func.func @transform_4(%arg0: i32) -> (i32, i32, i32) {
    %c0_i32 = arith.constant 0 : i32
    %c0_i32_0 = arith.constant 0 : i32
    %c0_i32_1 = arith.constant 0 : i32
    %c0_i32_2 = arith.constant 0 : i32
    return %c0_i32, %c0_i32_0, %c0_i32_1 : i32, i32, i32
  }
}

</mosaic_0001>

<llo_original>
// kernel: tpu_custom_call.1
$region0: #{tpu_custom_call.1}
  #allocation0 [shape = 'u32[]', space=smem, size = 0x4, offset = 0x4, fixed_abs, tag = 'smem constant byte address 0x4 - core index']
  #allocation1 [shape = 'u32[144,128]{1,0:T(1,128)}', space=vmem, size = 0x12000, scoped, tag = 'internal scratch']
  %s0 = inlined_call_operand.hbm [shape: f32[2,8,32], index: 0, kind: input, shape index: {}]
  %s1 = inlined_call_operand.vmem [shape: f32[2,1,8], index: 1, kind: input, shape index: {}]
  %s2 = inlined_call_operand.hbm [shape: f32[32,96], index: 2, kind: input, shape index: {}]
  %s3 = inlined_call_operand.vmem [shape: f32[1,96], index: 3, kind: input, shape index: {}]
  %s4 = inlined_call_operand.hbm [shape: f32[2,8,32], index: 4, kind: output, shape index: {}]
  %s5 = sld [smem:[#allocation0]]
  $region34: #{tpu_custom_call.1} parent=0
    _
  %s7 = ssub.s32 1, %s5
  %s8 = scalar_select 0, %s7, %s5
  $region1: #{tpu_custom_call.1} parent=0
    #allocation2 [shape = 'u8[8192]{0}', space=vmem, size = 0x2000, scoped, tag = 'input window, operand 0, single buffered']
    #allocation3 [shape = 's32[1]{0}', space=sflag, size = 0x4, scoped, tag = 'scoped memory for tpu_custom_call.1']
    #allocation4 [shape = 's32[1]{0}', space=sflag, size = 0x4, scoped, tag = 'scoped memory for tpu_custom_call.1']
    #allocation5 [shape = 'u8[16384]{0}', space=vmem, size = 0x4000, scoped, tag = 'input window, operand 2, single buffered']
    #allocation6 [shape = 's32[1]{0}', space=sflag, size = 0x4, scoped, tag = 'scoped memory for tpu_custom_call.1']
    #allocation7 [shape = 'u8[8192]{0}', space=vmem, size = 0x2000, scoped, tag = 'output window, operand 0, single buffered']
    %9 = vsyncpa [#allocation3], 0
    %10 = vsyncpa [#allocation6], 0
    %11 = vsyncpa [#allocation4], 0
    // Predicated region
    $region2: #{tpu_custom_call.1} parent=1 // pred_check
      _
    $region3: #{tpu_custom_call.1} parent=1 // pred_check_branch
      %13 = sbr.rel (0) target = $region5
    $region4: #{tpu_custom_call.1} parent=1 // pred_region
      %s15 = ssub.s32 256, 256
      %16 = vsyncadd [#allocation3], %s15
      %s17 = sshll.u32 [#allocation2], 4
      %s18 = int_to_ptr.vmem [resolvable:$true] %s17
      %23 = dma.hbm_to_vmem [thread:$0]  %s0, 256, %s18, [#allocation3], 128, 128, 8
    $region5: #{tpu_custom_call.1} parent=1 // pred_fallthru
      _
    // Predicated region
    $region6: #{tpu_custom_call.1} parent=1 // pred_check
      _
    $region7: #{tpu_custom_call.1} parent=1 // pred_check_branch
      %25 = sbr.rel (0) target = $region9
    $region8: #{tpu_custom_call.1} parent=1 // pred_region
      _
    $region9: #{tpu_custom_call.1} parent=1 // pred_fallthru
      _
    // Predicated region
    $region10: #{tpu_custom_call.1} parent=1 // pred_check
      _
    $region11: #{tpu_custom_call.1} parent=1 // pred_check_branch
      %27 = sbr.rel (0) target = $region13
    $region12: #{tpu_custom_call.1} parent=1 // pred_region
      %s29 = ssub.s32 512, 512
      %30 = vsyncadd [#allocation6], %s29
      %s31 = sshll.u32 [#allocation5], 4
      %s32 = int_to_ptr.vmem [resolvable:$true] %s31
      %37 = dma.hbm_to_vmem [thread:$0]  %s2, 512, %s32, [#allocation6], 128, 128, 8
    $region13: #{tpu_custom_call.1} parent=1 // pred_fallthru
      _
    // Predicated region
    $region14: #{tpu_custom_call.1} parent=1 // pred_check
      _
    $region15: #{tpu_custom_call.1} parent=1 // pred_check_branch
      %39 = sbr.rel (0) target = $region17
    $region16: #{tpu_custom_call.1} parent=1 // pred_region
      _
    $region17: #{tpu_custom_call.1} parent=1 // pred_fallthru
      _
    // Predicated region
    $region18: #{tpu_custom_call.1} parent=1 // pred_check
      _
    $region19: #{tpu_custom_call.1} parent=1 // pred_check_branch
      %41 = sbr.rel (0) target = $region21
    $region20: #{tpu_custom_call.1} parent=1 // pred_region
      %42 = dma.done [#allocation3], 256
    $region21: #{tpu_custom_call.1} parent=1 // pred_fallthru
      _
    // Predicated region
    $region22: #{tpu_custom_call.1} parent=1 // pred_check
      _
    $region23: #{tpu_custom_call.1} parent=1 // pred_check_branch
      %44 = sbr.rel (0) target = $region25
    $region24: #{tpu_custom_call.1} parent=1 // pred_region
      %45 = dma.done [#allocation6], 512
    $region25: #{tpu_custom_call.1} parent=1 // pred_fallthru
      _
    %v46 = vld [vmem:[#allocation2] sm:$0xff]
    %v47 = vld [vmem:[#allocation2 + $0x8] sm:$0xff]
    %v48 = vld [vmem:[#allocation5] sm:$0xff]
    %v49 = vld [vmem:[#allocation5 + $0x8] sm:$0xff]
    %v50 = vld [vmem:[#allocation5 + $0x10] sm:$0xff]
    %v51 = vld [vmem:[#allocation5 + $0x18] sm:$0xff]
    %v52 = vld [vmem:[%s3] sm:$0x1]
    %v54 = vlaneseq
    %v55 = vshrl.u32 %v54, 7
    %v56 = vsub.s32 0, %v55
    %v57 = vrot.slane %v52, %v56
    %vm59 = vcmask 261120
    %v61 = vsel %vm59, %v46, 0
    %v64 = vsel %vm59, %v47, 0
    %66 = vmatprep.subr.mxu0 0.0
    %67 = vmatpush1.msra.mxu0 %v48
    %68 = vmatprep.subr.mxu0 0.0
    %69 = vmatpush1.msra.mxu0 %v49
    %70 = vmatprep.subr.mxu0 0.0
    %71 = vmatpush1.msra.mxu0 %v50
    %72 = vmatprep.subr.mxu0 0.0
    %73 = vmatpush1.msra.mxu0 %v51
    %74 = vmatprep.subr.mxu0 0.0
    %75 = vmatpush1.msra.mxu0 0.0
    %76 = vmatprep.subr.mxu0 0.0
    %77 = vmatpush1.msra.mxu0 0.0
    %78 = vmatprep.subr.mxu0 0.0
    %79 = vmatpush1.msra.mxu0 0.0
    %80 = vmatprep.subr.mxu0 0.0
    %81 = vmatpush1.msra.mxu0 0.0
    %82 = vmatprep.subr.mxu0 0.0
    %83 = vmatpush1.msra.mxu0 0.0
    %84 = vmatprep.subr.mxu0 0.0
    %85 = vmatpush1.msra.mxu0 0.0
    %86 = vmatprep.subr.mxu0 0.0
    %87 = vmatpush1.msra.mxu0 0.0
    %88 = vmatprep.subr.mxu0 0.0
    %89 = vmatpush1.msra.mxu0 0.0
    %90 = vmatprep.subr.mxu0 0.0
    %91 = vmatpush1.msra.mxu0 0.0
    %92 = vmatprep.subr.mxu0 0.0
    %93 = vmatpush1.msra.mxu0 0.0
    %94 = vmatprep.subr.mxu0 0.0
    %95 = vmatpush1.msra.mxu0 0.0
    %96 = vmatprep.subr.mxu0 0.0
    %97 = vmatpush1.msra.mxu0 0.0
    %98 = vmatprep.subr.mxu0 0.0
    %99 = vmatpush1.msra.mxu0 0.0
    %100 = vmatprep.subr.mxu0 0.0
    %101 = vmatpush1.msra.mxu0 0.0
    %102 = vmatprep.subr.mxu0 0.0
    %103 = vmatpush1.msra.mxu0 0.0
    %104 = vmatprep.subr.mxu0 0.0
    %105 = vmatpush1.msra.mxu0 0.0
    %106 = vmatprep.subr.mxu0 0.0
    %107 = vmatpush1.msra.mxu0 0.0
    %108 = vmatprep.subr.mxu0 0.0
    %109 = vmatpush1.msra.mxu0 0.0
    %110 = vmatprep.subr.mxu0 0.0
    %111 = vmatpush1.msra.mxu0 0.0
    %112 = vmatprep.subr.mxu0 0.0
    %113 = vmatpush1.msra.mxu0 0.0
    %114 = vmatprep.subr.mxu0 0.0
    %115 = vmatpush1.msra.mxu0 0.0
    %116 = vmatprep.subr.mxu0 0.0
    %117 = vmatpush1.msra.mxu0 0.0
    %118 = vmatprep.subr.mxu0 0.0
    %119 = vmatpush1.msra.mxu0 0.0
    %120 = vmatprep.subr.mxu0 0.0
    %121 = vmatpush1.msra.mxu0 0.0
    %122 = vmatprep.subr.mxu0 0.0
    %123 = vmatpush1.msra.mxu0 0.0
    %124 = vmatprep.subr.mxu0 0.0
    %125 = vmatpush1.msra.mxu0 0.0
    %126 = vmatprep.subr.mxu0 0.0
    %127 = vmatpush1.msra.mxu0 0.0
    %128 = vmatprep.subr.mxu0 0.0
    %129 = vmatpush1.msra.mxu0 0.0
    %130 = vmatprep.mubr.f32.mxu0 0.0
    %131 = vmatmul.mubr.f32.gmra.mrb[0].mxu0 %v61
    %v132 = vpop.f32.mrb[0].mxu0
    %v133 = vadd.f32 %v57, %v132
    %v134 = vpop.f32.mrb[0].mxu0
    %135 = vmatprep.mubr.f32.mxu0 0.0
    %136 = vmatmul.mubr.f32.gmra.mrb[0].mxu0 %v64
    %v137 = vpop.f32.mrb[0].mxu0
    %v138 = vadd.f32 %v57, %v137
    %v139 = vpop.f32.mrb[0].mxu0
    %140 = vdwg.mxu0
    %v141 = vld [vmem:[%s1] sm:$0x1]
    %v142 = vld [vmem:[%s1 + $0x1] sm:$0x1]
    %v145 = vlaneseq
    %v146 = vshrl.u32 %v145, 7
    %v147 = vsub.s32 0, %v146
    %v148 = vrot.slane %v141, %v147
    %v149 = vlaneseq
    %v150 = vshrl.u32 %v149, 7
    %v151 = vsub.s32 0, %v150
    %v152 = vrot.slane %v142, %v151
    %156 = vrot.lane.b32.xlu0 %v133, 96
    %v157 = vpop.permute.xlu0 %156
    %vm158 = vcmask 64512
    %v159 = vsel %vm158, %v133, 0
    %v161 = vsel %vm158, %v157, 0
    %163 = vmatprep.subr.mxu0 0.0
    %164 = vmatpush1.xpose.msra.mxu0 %v161
    %165 = vmatprep.subr.mxu0 0.0
    %166 = vmatpush1.xpose.msra.mxu0 0.0
    %167 = vmatprep.subr.mxu0 0.0
    %168 = vmatpush1.xpose.msra.mxu0 0.0
    %169 = vmatprep.subr.mxu0 0.0
    %170 = vmatpush1.xpose.msra.mxu0 0.0
    %171 = vmatprep.subr.mxu0 0.0
    %172 = vmatpush1.xpose.msra.mxu0 0.0
    %173 = vmatprep.subr.mxu0 0.0
    %174 = vmatpush1.xpose.msra.mxu0 0.0
    %175 = vmatprep.subr.mxu0 0.0
    %176 = vmatpush1.xpose.msra.mxu0 0.0
    %177 = vmatprep.subr.mxu0 0.0
    %178 = vmatpush1.xpose.msra.mxu0 0.0
    %179 = vmatprep.subr.mxu0 0.0
    %180 = vmatpush1.xpose.msra.mxu0 0.0
    %181 = vmatprep.subr.mxu0 0.0
    %182 = vmatpush1.xpose.msra.mxu0 0.0
    %183 = vmatprep.subr.mxu0 0.0
    %184 = vmatpush1.xpose.msra.mxu0 0.0
    %185 = vmatprep.subr.mxu0 0.0
    %186 = vmatpush1.xpose.msra.mxu0 0.0
    %187 = vmatprep.subr.mxu0 0.0
    %188 = vmatpush1.xpose.msra.mxu0 0.0
    %189 = vmatprep.subr.mxu0 0.0
    %190 = vmatpush1.xpose.msra.mxu0 0.0
    %191 = vmatprep.subr.mxu0 0.0
    %192 = vmatpush1.xpose.msra.mxu0 0.0
    %193 = vmatprep.subr.mxu0 0.0
    %194 = vmatpush1.xpose.msra.mxu0 0.0
    %195 = vmatprep.subr.mxu0 0.0
    %196 = vmatpush1.xpose.msra.mxu0 0.0
    %197 = vmatprep.subr.mxu0 0.0
    %198 = vmatpush1.xpose.msra.mxu0 0.0
    %199 = vmatprep.subr.mxu0 0.0
    %200 = vmatpush1.xpose.msra.mxu0 0.0
    %201 = vmatprep.subr.mxu0 0.0
    %202 = vmatpush1.xpose.msra.mxu0 0.0
    %203 = vmatprep.subr.mxu0 0.0
    %204 = vmatpush1.xpose.msra.mxu0 0.0
    %205 = vmatprep.subr.mxu0 0.0
    %206 = vmatpush1.xpose.msra.mxu0 0.0
    %207 = vmatprep.subr.mxu0 0.0
    %208 = vmatpush1.xpose.msra.mxu0 0.0
    %209 = vmatprep.subr.mxu0 0.0
    %210 = vmatpush1.xpose.msra.mxu0 0.0
    %211 = vmatprep.subr.mxu0 0.0
    %212 = vmatpush1.xpose.msra.mxu0 0.0
    %213 = vmatprep.subr.mxu0 0.0
    %214 = vmatpush1.xpose.msra.mxu0 0.0
    %215 = vmatprep.subr.mxu0 0.0
    %216 = vmatpush1.xpose.msra.mxu0 0.0
    %217 = vmatprep.subr.mxu0 0.0
    %218 = vmatpush1.xpose.msra.mxu0 0.0
    %219 = vmatprep.subr.mxu0 0.0
    %220 = vmatpush1.xpose.msra.mxu0 0.0
    %221 = vmatprep.subr.mxu0 0.0
    %222 = vmatpush1.xpose.msra.mxu0 0.0
    %223 = vmatprep.subr.mxu0 0.0
    %224 = vmatpush1.xpose.msra.mxu0 0.0
    %225 = vmatprep.subr.mxu0 0.0
    %226 = vmatpush1.xpose.msra.mxu0 0.0
    %227 = vmatprep.mubr.f32.mxu0 0.0
    %228 = vmatmul.mubr.f32.gmra.mrb[0].mxu0 %v159
    %v229 = vpop.f32.mrb[0].mxu0
    %v230 = vadd.f32 %v148, %v229
    %v231 = vpop.f32.mrb[0].mxu0
    %232 = vdwg.mxu0
    %234 = vrot.lane.b32.xlu0 %v138, 96
    %v235 = vpop.permute.xlu0 %234
    %v236 = vsel %vm158, %v138, 0
    %v238 = vsel %vm158, %v235, 0
    %240 = vmatprep.subr.mxu0 0.0
    %241 = vmatpush1.xpose.msra.mxu0 %v238
    %242 = vmatprep.subr.mxu0 0.0
    %243 = vmatpush1.xpose.msra.mxu0 0.0
    %244 = vmatprep.subr.mxu0 0.0
    %245 = vmatpush1.xpose.msra.mxu0 0.0
    %246 = vmatprep.subr.mxu0 0.0
    %247 = vmatpush1.xpose.msra.mxu0 0.0
    %248 = vmatprep.subr.mxu0 0.0
    %249 = vmatpush1.xpose.msra.mxu0 0.0
    %250 = vmatprep.subr.mxu0 0.0
    %251 = vmatpush1.xpose.msra.mxu0 0.0
    %252 = vmatprep.subr.mxu0 0.0
    %253 = vmatpush1.xpose.msra.mxu0 0.0
    %254 = vmatprep.subr.mxu0 0.0
    %255 = vmatpush1.xpose.msra.mxu0 0.0
    %256 = vmatprep.subr.mxu0 0.0
    %257 = vmatpush1.xpose.msra.mxu0 0.0
    %258 = vmatprep.subr.mxu0 0.0
    %259 = vmatpush1.xpose.msra.mxu0 0.0
    %260 = vmatprep.subr.mxu0 0.0
    %261 = vmatpush1.xpose.msra.mxu0 0.0
    %262 = vmatprep.subr.mxu0 0.0
    %263 = vmatpush1.xpose.msra.mxu0 0.0
    %264 = vmatprep.subr.mxu0 0.0
    %265 = vmatpush1.xpose.msra.mxu0 0.0
    %266 = vmatprep.subr.mxu0 0.0
    %267 = vmatpush1.xpose.msra.mxu0 0.0
    %268 = vmatprep.subr.mxu0 0.0
    %269 = vmatpush1.xpose.msra.mxu0 0.0
    %270 = vmatprep.subr.mxu0 0.0
    %271 = vmatpush1.xpose.msra.mxu0 0.0
    %272 = vmatprep.subr.mxu0 0.0
    %273 = vmatpush1.xpose.msra.mxu0 0.0
    %274 = vmatprep.subr.mxu0 0.0
    %275 = vmatpush1.xpose.msra.mxu0 0.0
    %276 = vmatprep.subr.mxu0 0.0
    %277 = vmatpush1.xpose.msra.mxu0 0.0
    %278 = vmatprep.subr.mxu0 0.0
    %279 = vmatpush1.xpose.msra.mxu0 0.0
    %280 = vmatprep.subr.mxu0 0.0
    %281 = vmatpush1.xpose.msra.mxu0 0.0
    %282 = vmatprep.subr.mxu0 0.0
    %283 = vmatpush1.xpose.msra.mxu0 0.0
    %284 = vmatprep.subr.mxu0 0.0
    %285 = vmatpush1.xpose.msra.mxu0 0.0
    %286 = vmatprep.subr.mxu0 0.0
    %287 = vmatpush1.xpose.msra.mxu0 0.0
    %288 = vmatprep.subr.mxu0 0.0
    %289 = vmatpush1.xpose.msra.mxu0 0.0
    %290 = vmatprep.subr.mxu0 0.0
    %291 = vmatpush1.xpose.msra.mxu0 0.0
    %292 = vmatprep.subr.mxu0 0.0
    %293 = vmatpush1.xpose.msra.mxu0 0.0
    %294 = vmatprep.subr.mxu0 0.0
    %295 = vmatpush1.xpose.msra.mxu0 0.0
    %296 = vmatprep.subr.mxu0 0.0
    %297 = vmatpush1.xpose.msra.mxu0 0.0
    %298 = vmatprep.subr.mxu0 0.0
    %299 = vmatpush1.xpose.msra.mxu0 0.0
    %300 = vmatprep.subr.mxu0 0.0
    %301 = vmatpush1.xpose.msra.mxu0 0.0
    %302 = vmatprep.subr.mxu0 0.0
    %303 = vmatpush1.xpose.msra.mxu0 0.0
    %304 = vmatprep.mubr.f32.mxu0 0.0
    %305 = vmatmul.mubr.f32.gmra.mrb[0].mxu0 %v236
    %v306 = vpop.f32.mrb[0].mxu0
    %v307 = vadd.f32 %v152, %v306
    %v308 = vpop.f32.mrb[0].mxu0
    %309 = vdwg.mxu0
    %v310 = vsel %vm158, %v230, -inf
    %311 = vmax.xlane.f32.xlu0 %v310
    %v312 = vpop.xlane.xlu0 %311
    %v313 = vsel %vm158, %v307, -inf
    %314 = vmax.xlane.f32.xlu0 %v313
    %v315 = vpop.xlane.xlu0 %314
    %v316 = vsub.f32 %v230, %v312
    %v317 = vsub.f32 %v307, %v315
    %v318 = vmul.f32 %v316, 1.442695
    %v319 = vpow.pop %v318
    %v320 = vmul.f32 %v317, 1.442695
    %v321 = vpow.pop %v320
    %v322 = vsel %vm158, %v319, 0.0
    %323 = vadd.xlane.f32.xlu0 %v322
    %v324 = vpop.xlane.xlu0 %323
    %v325 = vsel %vm158, %v321, 0.0
    %326 = vadd.xlane.f32.xlu0 %v325
    %v327 = vpop.xlane.xlu0 %326
    %v328 = vrcp.pop %v324
    %v329 = vmul.f32 1.0, %v328
    %v330 = vrcp.pop %v327
    %v331 = vmul.f32 1.0, %v330
    %v332 = vmul.f32 %v319, %v329
    %v333 = vmul.f32 %v321, %v331
    %334 = vrot.lane.b32.xlu0 %v133, 64
    %v335 = vpop.permute.xlu0 %334
    %v338 = vsel %vm158, %v332, 0
    %340 = vmatprep.subr.mxu0 0.0
    %341 = vmatpush1.msra.mxu0 %v335
    %342 = vmatprep.subr.mxu0 0.0
    %343 = vmatpush1.msra.mxu0 0.0
    %344 = vmatprep.subr.mxu0 0.0
    %345 = vmatpush1.msra.mxu0 0.0
    %346 = vmatprep.subr.mxu0 0.0
    %347 = vmatpush1.msra.mxu0 0.0
    %348 = vmatprep.subr.mxu0 0.0
    %349 = vmatpush1.msra.mxu0 0.0
    %350 = vmatprep.subr.mxu0 0.0
    %351 = vmatpush1.msra.mxu0 0.0
    %352 = vmatprep.subr.mxu0 0.0
    %353 = vmatpush1.msra.mxu0 0.0
    %354 = vmatprep.subr.mxu0 0.0
    %355 = vmatpush1.msra.mxu0 0.0
    %356 = vmatprep.subr.mxu0 0.0
    %357 = vmatpush1.msra.mxu0 0.0
    %358 = vmatprep.subr.mxu0 0.0
    %359 = vmatpush1.msra.mxu0 0.0
    %360 = vmatprep.subr.mxu0 0.0
    %361 = vmatpush1.msra.mxu0 0.0
    %362 = vmatprep.subr.mxu0 0.0
    %363 = vmatpush1.msra.mxu0 0.0
    %364 = vmatprep.subr.mxu0 0.0
    %365 = vmatpush1.msra.mxu0 0.0
    %366 = vmatprep.subr.mxu0 0.0
    %367 = vmatpush1.msra.mxu0 0.0
    %368 = vmatprep.subr.mxu0 0.0
    %369 = vmatpush1.msra.mxu0 0.0
    %370 = vmatprep.subr.mxu0 0.0
    %371 = vmatpush1.msra.mxu0 0.0
    %372 = vmatprep.subr.mxu0 0.0
    %373 = vmatpush1.msra.mxu0 0.0
    %374 = vmatprep.subr.mxu0 0.0
    %375 = vmatpush1.msra.mxu0 0.0
    %376 = vmatprep.subr.mxu0 0.0
    %377 = vmatpush1.msra.mxu0 0.0
    %378 = vmatprep.subr.mxu0 0.0
    %379 = vmatpush1.msra.mxu0 0.0
    %380 = vmatprep.subr.mxu0 0.0
    %381 = vmatpush1.msra.mxu0 0.0
    %382 = vmatprep.subr.mxu0 0.0
    %383 = vmatpush1.msra.mxu0 0.0
    %384 = vmatprep.subr.mxu0 0.0
    %385 = vmatpush1.msra.mxu0 0.0
    %386 = vmatprep.subr.mxu0 0.0
    %387 = vmatpush1.msra.mxu0 0.0
    %388 = vmatprep.subr.mxu0 0.0
    %389 = vmatpush1.msra.mxu0 0.0
    %390 = vmatprep.subr.mxu0 0.0
    %391 = vmatpush1.msra.mxu0 0.0
    %392 = vmatprep.subr.mxu0 0.0
    %393 = vmatpush1.msra.mxu0 0.0
    %394 = vmatprep.subr.mxu0 0.0
    %395 = vmatpush1.msra.mxu0 0.0
    %396 = vmatprep.subr.mxu0 0.0
    %397 = vmatpush1.msra.mxu0 0.0
    %398 = vmatprep.subr.mxu0 0.0
    %399 = vmatpush1.msra.mxu0 0.0
    %400 = vmatprep.subr.mxu0 0.0
    %401 = vmatpush1.msra.mxu0 0.0
    %402 = vmatprep.subr.mxu0 0.0
    %403 = vmatpush1.msra.mxu0 0.0
    %404 = vmatprep.mubr.f32.mxu0 0.0
    %405 = vmatmul.mubr.f32.gmra.mrb[0].mxu0 %v338
    %v406 = vpop.f32.mrb[0].mxu0
    %v407 = vadd.f32 0.0, %v406
    %v408 = vpop.f32.mrb[0].mxu0
    %409 = vdwg.mxu0
    %410 = vrot.lane.b32.xlu0 %v138, 64
    %v411 = vpop.permute.xlu0 %410
    %v414 = vsel %vm158, %v333, 0
    %416 = vmatprep.subr.mxu0 0.0
    %417 = vmatpush1.msra.mxu0 %v411
    %418 = vmatprep.subr.mxu0 0.0
    %419 = vmatpush1.msra.mxu0 0.0
    %420 = vmatprep.subr.mxu0 0.0
    %421 = vmatpush1.msra.mxu0 0.0
    %422 = vmatprep.subr.mxu0 0.0
    %423 = vmatpush1.msra.mxu0 0.0
    %424 = vmatprep.subr.mxu0 0.0
    %425 = vmatpush1.msra.mxu0 0.0
    %426 = vmatprep.subr.mxu0 0.0
    %427 = vmatpush1.msra.mxu0 0.0
    %428 = vmatprep.subr.mxu0 0.0
    %429 = vmatpush1.msra.mxu0 0.0
    %430 = vmatprep.subr.mxu0 0.0
    %431 = vmatpush1.msra.mxu0 0.0
    %432 = vmatprep.subr.mxu0 0.0
    %433 = vmatpush1.msra.mxu0 0.0
    %434 = vmatprep.subr.mxu0 0.0
    %435 = vmatpush1.msra.mxu0 0.0
    %436 = vmatprep.subr.mxu0 0.0
    %437 = vmatpush1.msra.mxu0 0.0
    %438 = vmatprep.subr.mxu0 0.0
    %439 = vmatpush1.msra.mxu0 0.0
    %440 = vmatprep.subr.mxu0 0.0
    %441 = vmatpush1.msra.mxu0 0.0
    %442 = vmatprep.subr.mxu0 0.0
    %443 = vmatpush1.msra.mxu0 0.0
    %444 = vmatprep.subr.mxu0 0.0
    %445 = vmatpush1.msra.mxu0 0.0
    %446 = vmatprep.subr.mxu0 0.0
    %447 = vmatpush1.msra.mxu0 0.0
    %448 = vmatprep.subr.mxu0 0.0
    %449 = vmatpush1.msra.mxu0 0.0
    %450 = vmatprep.subr.mxu0 0.0
    %451 = vmatpush1.msra.mxu0 0.0
    %452 = vmatprep.subr.mxu0 0.0
    %453 = vmatpush1.msra.mxu0 0.0
    %454 = vmatprep.subr.mxu0 0.0
    %455 = vmatpush1.msra.mxu0 0.0
    %456 = vmatprep.subr.mxu0 0.0
    %457 = vmatpush1.msra.mxu0 0.0
    %458 = vmatprep.subr.mxu0 0.0
    %459 = vmatpush1.msra.mxu0 0.0
    %460 = vmatprep.subr.mxu0 0.0
    %461 = vmatpush1.msra.mxu0 0.0
    %462 = vmatprep.subr.mxu0 0.0
    %463 = vmatpush1.msra.mxu0 0.0
    %464 = vmatprep.subr.mxu0 0.0
    %465 = vmatpush1.msra.mxu0 0.0
    %466 = vmatprep.subr.mxu0 0.0
    %467 = vmatpush1.msra.mxu0 0.0
    %468 = vmatprep.subr.mxu0 0.0
    %469 = vmatpush1.msra.mxu0 0.0
    %470 = vmatprep.subr.mxu0 0.0
    %471 = vmatpush1.msra.mxu0 0.0
    %472 = vmatprep.subr.mxu0 0.0
    %473 = vmatpush1.msra.mxu0 0.0
    %474 = vmatprep.subr.mxu0 0.0
    %475 = vmatpush1.msra.mxu0 0.0
    %476 = vmatprep.subr.mxu0 0.0
    %477 = vmatpush1.msra.mxu0 0.0
    %478 = vmatprep.subr.mxu0 0.0
    %479 = vmatpush1.msra.mxu0 0.0
    %480 = vmatprep.mubr.f32.mxu0 0.0
    %481 = vmatmul.mubr.f32.gmra.mrb[0].mxu0 %v414
    %v482 = vpop.f32.mrb[0].mxu0
    %v483 = vadd.f32 0.0, %v482
    %v484 = vpop.f32.mrb[0].mxu0
    %485 = vdwg.mxu0
    %486 = vst.msk [vmem:[#allocation7] sm:$0xff] %vm158, %v407
    %487 = vst.msk [vmem:[#allocation7 + $0x8] sm:$0xff] %vm158, %v483
    %488 = vrot.lane.b32.xlu0 %v133, 120
    %v489 = vpop.permute.xlu0 %488
    %490 = vrot.lane.b32.xlu0 %v133, 88
    %v491 = vpop.permute.xlu0 %490
    %v492 = vsel %vm158, %v489, 0
    %v494 = vsel %vm158, %v491, 0
    %496 = vmatprep.subr.mxu0 0.0
    %497 = vmatpush1.xpose.msra.mxu0 %v494
    %498 = vmatprep.subr.mxu0 0.0
    %499 = vmatpush1.xpose.msra.mxu0 0.0
    %500 = vmatprep.subr.mxu0 0.0
    %501 = vmatpush1.xpose.msra.mxu0 0.0
    %502 = vmatprep.subr.mxu0 0.0
    %503 = vmatpush1.xpose.msra.mxu0 0.0
    %504 = vmatprep.subr.mxu0 0.0
    %505 = vmatpush1.xpose.msra.mxu0 0.0
    %506 = vmatprep.subr.mxu0 0.0
    %507 = vmatpush1.xpose.msra.mxu0 0.0
    %508 = vmatprep.subr.mxu0 0.0
    %509 = vmatpush1.xpose.msra.mxu0 0.0
    %510 = vmatprep.subr.mxu0 0.0
    %511 = vmatpush1.xpose.msra.mxu0 0.0
    %512 = vmatprep.subr.mxu0 0.0
    %513 = vmatpush1.xpose.msra.mxu0 0.0
    %514 = vmatprep.subr.mxu0 0.0
    %515 = vmatpush1.xpose.msra.mxu0 0.0
    %516 = vmatprep.subr.mxu0 0.0
    %517 = vmatpush1.xpose.msra.mxu0 0.0
    %518 = vmatprep.subr.mxu0 0.0
    %519 = vmatpush1.xpose.msra.mxu0 0.0
    %520 = vmatprep.subr.mxu0 0.0
    %521 = vmatpush1.xpose.msra.mxu0 0.0
    %522 = vmatprep.subr.mxu0 0.0
    %523 = vmatpush1.xpose.msra.mxu0 0.0
    %524 = vmatprep.subr.mxu0 0.0
    %525 = vmatpush1.xpose.msra.mxu0 0.0
    %526 = vmatprep.subr.mxu0 0.0
    %527 = vmatpush1.xpose.msra.mxu0 0.0
    %528 = vmatprep.subr.mxu0 0.0
    %529 = vmatpush1.xpose.msra.mxu0 0.0
    %530 = vmatprep.subr.mxu0 0.0
    %531 = vmatpush1.xpose.msra.mxu0 0.0
    %532 = vmatprep.subr.mxu0 0.0
    %533 = vmatpush1.xpose.msra.mxu0 0.0
    %534 = vmatprep.subr.mxu0 0.0
    %535 = vmatpush1.xpose.msra.mxu0 0.0
    %536 = vmatprep.subr.mxu0 0.0
    %537 = vmatpush1.xpose.msra.mxu0 0.0
    %538 = vmatprep.subr.mxu0 0.0
    %539 = vmatpush1.xpose.msra.mxu0 0.0
    %540 = vmatprep.subr.mxu0 0.0
    %541 = vmatpush1.xpose.msra.mxu0 0.0
    %542 = vmatprep.subr.mxu0 0.0
    %543 = vmatpush1.xpose.msra.mxu0 0.0
    %544 = vmatprep.subr.mxu0 0.0
    %545 = vmatpush1.xpose.msra.mxu0 0.0
    %546 = vmatprep.subr.mxu0 0.0
    %547 = vmatpush1.xpose.msra.mxu0 0.0
    %548 = vmatprep.subr.mxu0 0.0
    %549 = vmatpush1.xpose.msra.mxu0 0.0
    %550 = vmatprep.subr.mxu0 0.0
    %551 = vmatpush1.xpose.msra.mxu0 0.0
    %552 = vmatprep.subr.mxu0 0.0
    %553 = vmatpush1.xpose.msra.mxu0 0.0
    %554 = vmatprep.subr.mxu0 0.0
    %555 = vmatpush1.xpose.msra.mxu0 0.0
    %556 = vmatprep.subr.mxu0 0.0
    %557 = vmatpush1.xpose.msra.mxu0 0.0
    %558 = vmatprep.subr.mxu0 0.0
    %559 = vmatpush1.xpose.msra.mxu0 0.0
    %560 = vmatprep.mubr.f32.mxu0 0.0
    %561 = vmatmul.mubr.f32.gmra.mrb[0].mxu0 %v492
    %v562 = vpop.f32.mrb[0].mxu0
    %v563 = vadd.f32 %v148, %v562
    %v564 = vpop.f32.mrb[0].mxu0
    %565 = vdwg.mxu0
    %566 = vrot.lane.b32.xlu0 %v138, 120
    %v567 = vpop.permute.xlu0 %566
    %568 = vrot.lane.b32.xlu0 %v138, 88
    %v569 = vpop.permute.xlu0 %568
    %v570 = vsel %vm158, %v567, 0
    %v572 = vsel %vm158, %v569, 0
    %574 = vmatprep.subr.mxu0 0.0
    %575 = vmatpush1.xpose.msra.mxu0 %v572
    %576 = vmatprep.subr.mxu0 0.0
    %577 = vmatpush1.xpose.msra.mxu0 0.0
    %578 = vmatprep.subr.mxu0 0.0
    %579 = vmatpush1.xpose.msra.mxu0 0.0
    %580 = vmatprep.subr.mxu0 0.0
    %581 = vmatpush1.xpose.msra.mxu0 0.0
    %582 = vmatprep.subr.mxu0 0.0
    %583 = vmatpush1.xpose.msra.mxu0 0.0
    %584 = vmatprep.subr.mxu0 0.0
    %585 = vmatpush1.xpose.msra.mxu0 0.0
    %586 = vmatprep.subr.mxu0 0.0
    %587 = vmatpush1.xpose.msra.mxu0 0.0
    %588 = vmatprep.subr.mxu0 0.0
    %589 = vmatpush1.xpose.msra.mxu0 0.0
    %590 = vmatprep.subr.mxu0 0.0
    %591 = vmatpush1.xpose.msra.mxu0 0.0
    %592 = vmatprep.subr.mxu0 0.0
    %593 = vmatpush1.xpose.msra.mxu0 0.0
    %594 = vmatprep.subr.mxu0 0.0
    %595 = vmatpush1.xpose.msra.mxu0 0.0
    %596 = vmatprep.subr.mxu0 0.0
    %597 = vmatpush1.xpose.msra.mxu0 0.0
    %598 = vmatprep.subr.mxu0 0.0
    %599 = vmatpush1.xpose.msra.mxu0 0.0
    %600 = vmatprep.subr.mxu0 0.0
    %601 = vmatpush1.xpose.msra.mxu0 0.0
    %602 = vmatprep.subr.mxu0 0.0
    %603 = vmatpush1.xpose.msra.mxu0 0.0
    %604 = vmatprep.subr.mxu0 0.0
    %605 = vmatpush1.xpose.msra.mxu0 0.0
    %606 = vmatprep.subr.mxu0 0.0
    %607 = vmatpush1.xpose.msra.mxu0 0.0
    %608 = vmatprep.subr.mxu0 0.0
    %609 = vmatpush1.xpose.msra.mxu0 0.0
    %610 = vmatprep.subr.mxu0 0.0
    %611 = vmatpush1.xpose.msra.mxu0 0.0
    %612 = vmatprep.subr.mxu0 0.0
    %613 = vmatpush1.xpose.msra.mxu0 0.0
    %614 = vmatprep.subr.mxu0 0.0
    %615 = vmatpush1.xpose.msra.mxu0 0.0
    %616 = vmatprep.subr.mxu0 0.0
    %617 = vmatpush1.xpose.msra.mxu0 0.0
    %618 = vmatprep.subr.mxu0 0.0
    %619 = vmatpush1.xpose.msra.mxu0 0.0
    %620 = vmatprep.subr.mxu0 0.0
    %621 = vmatpush1.xpose.msra.mxu0 0.0
    %622 = vmatprep.subr.mxu0 0.0
    %623 = vmatpush1.xpose.msra.mxu0 0.0
    %624 = vmatprep.subr.mxu0 0.0
    %625 = vmatpush1.xpose.msra.mxu0 0.0
    %626 = vmatprep.subr.mxu0 0.0
    %627 = vmatpush1.xpose.msra.mxu0 0.0
    %628 = vmatprep.subr.mxu0 0.0
    %629 = vmatpush1.xpose.msra.mxu0 0.0
    %630 = vmatprep.subr.mxu0 0.0
    %631 = vmatpush1.xpose.msra.mxu0 0.0
    %632 = vmatprep.subr.mxu0 0.0
    %633 = vmatpush1.xpose.msra.mxu0 0.0
    %634 = vmatprep.subr.mxu0 0.0
    %635 = vmatpush1.xpose.msra.mxu0 0.0
    %636 = vmatprep.subr.mxu0 0.0
    %637 = vmatpush1.xpose.msra.mxu0 0.0
    %638 = vmatprep.mubr.f32.mxu0 0.0
    %639 = vmatmul.mubr.f32.gmra.mrb[0].mxu0 %v570
    %v640 = vpop.f32.mrb[0].mxu0
    %v641 = vadd.f32 %v152, %v640
    %v642 = vpop.f32.mrb[0].mxu0
    %643 = vdwg.mxu0
    %v644 = vsel %vm158, %v563, -inf
    %645 = vmax.xlane.f32.xlu0 %v644
    %v646 = vpop.xlane.xlu0 %645
    %v647 = vsel %vm158, %v641, -inf
    %648 = vmax.xlane.f32.xlu0 %v647
    %v649 = vpop.xlane.xlu0 %648
    %v650 = vsub.f32 %v563, %v646
    %v651 = vsub.f32 %v641, %v649
    %v652 = vmul.f32 %v650, 1.442695
    %v653 = vpow.pop %v652
    %v654 = vmul.f32 %v651, 1.442695
    %v655 = vpow.pop %v654
    %v656 = vsel %vm158, %v653, 0.0
    %657 = vadd.xlane.f32.xlu0 %v656
    %v658 = vpop.xlane.xlu0 %657
    %v659 = vsel %vm158, %v655, 0.0
    %660 = vadd.xlane.f32.xlu0 %v659
    %v661 = vpop.xlane.xlu0 %660
    %v662 = vrcp.pop %v658
    %v663 = vmul.f32 1.0, %v662
    %v664 = vrcp.pop %v661
    %v665 = vmul.f32 1.0, %v664
    %v666 = vmul.f32 %v653, %v663
    %v667 = vmul.f32 %v655, %v665
    %668 = vrot.lane.b32.xlu0 %v133, 56
    %v669 = vpop.permute.xlu0 %668
    %v672 = vsel %vm158, %v666, 0
    %674 = vmatprep.subr.mxu0 0.0
    %675 = vmatpush1.msra.mxu0 %v669
    %676 = vmatprep.subr.mxu0 0.0
    %677 = vmatpush1.msra.mxu0 0.0
    %678 = vmatprep.subr.mxu0 0.0
    %679 = vmatpush1.msra.mxu0 0.0
    %680 = vmatprep.subr.mxu0 0.0
    %681 = vmatpush1.msra.mxu0 0.0
    %682 = vmatprep.subr.mxu0 0.0
    %683 = vmatpush1.msra.mxu0 0.0
    %684 = vmatprep.subr.mxu0 0.0
    %685 = vmatpush1.msra.mxu0 0.0
    %686 = vmatprep.subr.mxu0 0.0
    %687 = vmatpush1.msra.mxu0 0.0
    %688 = vmatprep.subr.mxu0 0.0
    %689 = vmatpush1.msra.mxu0 0.0
    %690 = vmatprep.subr.mxu0 0.0
    %691 = vmatpush1.msra.mxu0 0.0
    %692 = vmatprep.subr.mxu0 0.0
    %693 = vmatpush1.msra.mxu0 0.0
    %694 = vmatprep.subr.mxu0 0.0
    %695 = vmatpush1.msra.mxu0 0.0
    %696 = vmatprep.subr.mxu0 0.0
    %697 = vmatpush1.msra.mxu0 0.0
    %698 = vmatprep.subr.mxu0 0.0
    %699 = vmatpush1.msra.mxu0 0.0
    %700 = vmatprep.subr.mxu0 0.0
    %701 = vmatpush1.msra.mxu0 0.0
    %702 = vmatprep.subr.mxu0 0.0
    %703 = vmatpush1.msra.mxu0 0.0
    %704 = vmatprep.subr.mxu0 0.0
    %705 = vmatpush1.msra.mxu0 0.0
    %706 = vmatprep.subr.mxu0 0.0
    %707 = vmatpush1.msra.mxu0 0.0
    %708 = vmatprep.subr.mxu0 0.0
    %709 = vmatpush1.msra.mxu0 0.0
    %710 = vmatprep.subr.mxu0 0.0
    %711 = vmatpush1.msra.mxu0 0.0
    %712 = vmatprep.subr.mxu0 0.0
    %713 = vmatpush1.msra.mxu0 0.0
    %714 = vmatprep.subr.mxu0 0.0
    %715 = vmatpush1.msra.mxu0 0.0
    %716 = vmatprep.subr.mxu0 0.0
    %717 = vmatpush1.msra.mxu0 0.0
    %718 = vmatprep.subr.mxu0 0.0
    %719 = vmatpush1.msra.mxu0 0.0
    %720 = vmatprep.subr.mxu0 0.0
    %721 = vmatpush1.msra.mxu0 0.0
    %722 = vmatprep.subr.mxu0 0.0
    %723 = vmatpush1.msra.mxu0 0.0
    %724 = vmatprep.subr.mxu0 0.0
    %725 = vmatpush1.msra.mxu0 0.0
    %726 = vmatprep.subr.mxu0 0.0
    %727 = vmatpush1.msra.mxu0 0.0
    %728 = vmatprep.subr.mxu0 0.0
    %729 = vmatpush1.msra.mxu0 0.0
    %730 = vmatprep.subr.mxu0 0.0
    %731 = vmatpush1.msra.mxu0 0.0
    %732 = vmatprep.subr.mxu0 0.0
    %733 = vmatpush1.msra.mxu0 0.0
    %734 = vmatprep.subr.mxu0 0.0
    %735 = vmatpush1.msra.mxu0 0.0
    %736 = vmatprep.subr.mxu0 0.0
    %737 = vmatpush1.msra.mxu0 0.0
    %738 = vmatprep.mubr.f32.mxu0 0.0
    %739 = vmatmul.mubr.f32.gmra.mrb[0].mxu0 %v672
    %v740 = vpop.f32.mrb[0].mxu0
    %v741 = vadd.f32 0.0, %v740
    %v742 = vpop.f32.mrb[0].mxu0
    %743 = vdwg.mxu0
    %744 = vrot.lane.b32.xlu0 %v138, 56
    %v745 = vpop.permute.xlu0 %744
    %v748 = vsel %vm158, %v667, 0
    %750 = vmatprep.subr.mxu0 0.0
    %751 = vmatpush1.msra.mxu0 %v745
    %752 = vmatprep.subr.mxu0 0.0
    %753 = vmatpush1.msra.mxu0 0.0
    %754 = vmatprep.subr.mxu0 0.0
    %755 = vmatpush1.msra.mxu0 0.0
    %756 = vmatprep.subr.mxu0 0.0
    %757 = vmatpush1.msra.mxu0 0.0
    %758 = vmatprep.subr.mxu0 0.0
    %759 = vmatpush1.msra.mxu0 0.0
    %760 = vmatprep.subr.mxu0 0.0
    %761 = vmatpush1.msra.mxu0 0.0
    %762 = vmatprep.subr.mxu0 0.0
    %763 = vmatpush1.msra.mxu0 0.0
    %764 = vmatprep.subr.mxu0 0.0
    %765 = vmatpush1.msra.mxu0 0.0
    %766 = vmatprep.subr.mxu0 0.0
    %767 = vmatpush1.msra.mxu0 0.0
    %768 = vmatprep.subr.mxu0 0.0
    %769 = vmatpush1.msra.mxu0 0.0
    %770 = vmatprep.subr.mxu0 0.0
    %771 = vmatpush1.msra.mxu0 0.0
    %772 = vmatprep.subr.mxu0 0.0
    %773 = vmatpush1.msra.mxu0 0.0
    %774 = vmatprep.subr.mxu0 0.0
    %775 = vmatpush1.msra.mxu0 0.0
    %776 = vmatprep.subr.mxu0 0.0
    %777 = vmatpush1.msra.mxu0 0.0
    %778 = vmatprep.subr.mxu0 0.0
    %779 = vmatpush1.msra.mxu0 0.0
    %780 = vmatprep.subr.mxu0 0.0
    %781 = vmatpush1.msra.mxu0 0.0
    %782 = vmatprep.subr.mxu0 0.0
    %783 = vmatpush1.msra.mxu0 0.0
    %784 = vmatprep.subr.mxu0 0.0
    %785 = vmatpush1.msra.mxu0 0.0
    %786 = vmatprep.subr.mxu0 0.0
    %787 = vmatpush1.msra.mxu0 0.0
    %788 = vmatprep.subr.mxu0 0.0
    %789 = vmatpush1.msra.mxu0 0.0
    %790 = vmatprep.subr.mxu0 0.0
    %791 = vmatpush1.msra.mxu0 0.0
    %792 = vmatprep.subr.mxu0 0.0
    %793 = vmatpush1.msra.mxu0 0.0
    %794 = vmatprep.subr.mxu0 0.0
    %795 = vmatpush1.msra.mxu0 0.0
    %796 = vmatprep.subr.mxu0 0.0
    %797 = vmatpush1.msra.mxu0 0.0
    %798 = vmatprep.subr.mxu0 0.0
    %799 = vmatpush1.msra.mxu0 0.0
    %800 = vmatprep.subr.mxu0 0.0
    %801 = vmatpush1.msra.mxu0 0.0
    %802 = vmatprep.subr.mxu0 0.0
    %803 = vmatpush1.msra.mxu0 0.0
    %804 = vmatprep.subr.mxu0 0.0
    %805 = vmatpush1.msra.mxu0 0.0
    %806 = vmatprep.subr.mxu0 0.0
    %807 = vmatpush1.msra.mxu0 0.0
    %808 = vmatprep.subr.mxu0 0.0
    %809 = vmatpush1.msra.mxu0 0.0
    %810 = vmatprep.subr.mxu0 0.0
    %811 = vmatpush1.msra.mxu0 0.0
    %812 = vmatprep.subr.mxu0 0.0
    %813 = vmatpush1.msra.mxu0 0.0
    %814 = vmatprep.mubr.f32.mxu0 0.0
    %815 = vmatmul.mubr.f32.gmra.mrb[0].mxu0 %v748
    %v816 = vpop.f32.mrb[0].mxu0
    %v817 = vadd.f32 0.0, %v816
    %v818 = vpop.f32.mrb[0].mxu0
    %819 = vdwg.mxu0
    %822 = vrot.lane.b32.xlu0 %v741, 8
    %v823 = vpop.permute.xlu0 %822
    %824 = vrot.lane.b32.xlu0 %v817, 8
    %v825 = vpop.permute.xlu0 %824
    %vm828 = vcmask 130112
    %829 = vst.msk [vmem:[#allocation7] sm:$0xff] %vm828, %v823
    %830 = vst.msk [vmem:[#allocation7 + $0x8] sm:$0xff] %vm828, %v825
    %831 = vrot.lane.b32.xlu0 %v133, 112
    %v832 = vpop.permute.xlu0 %831
    %833 = vrot.lane.b32.xlu0 %v133, 80
    %v834 = vpop.permute.xlu0 %833
    %v835 = vsel %vm158, %v832, 0
    %v837 = vsel %vm158, %v834, 0
    %839 = vmatprep.subr.mxu0 0.0
    %840 = vmatpush1.xpose.msra.mxu0 %v837
    %841 = vmatprep.subr.mxu0 0.0
    %842 = vmatpush1.xpose.msra.mxu0 0.0
    %843 = vmatprep.subr.mxu0 0.0
    %844 = vmatpush1.xpose.msra.mxu0 0.0
    %845 = vmatprep.subr.mxu0 0.0
    %846 = vmatpush1.xpose.msra.mxu0 0.0
    %847 = vmatprep.subr.mxu0 0.0
    %848 = vmatpush1.xpose.msra.mxu0 0.0
    %849 = vmatprep.subr.mxu0 0.0
    %850 = vmatpush1.xpose.msra.mxu0 0.0
    %851 = vmatprep.subr.mxu0 0.0
    %852 = vmatpush1.xpose.msra.mxu0 0.0
    %853 = vmatprep.subr.mxu0 0.0
    %854 = vmatpush1.xpose.msra.mxu0 0.0
    %855 = vmatprep.subr.mxu0 0.0
    %856 = vmatpush1.xpose.msra.mxu0 0.0
    %857 = vmatprep.subr.mxu0 0.0
    %858 = vmatpush1.xpose.msra.mxu0 0.0
    %859 = vmatprep.subr.mxu0 0.0
    %860 = vmatpush1.xpose.msra.mxu0 0.0
    %861 = vmatprep.subr.mxu0 0.0
    %862 = vmatpush1.xpose.msra.mxu0 0.0
    %863 = vmatprep.subr.mxu0 0.0
    %864 = vmatpush1.xpose.msra.mxu0 0.0
    %865 = vmatprep.subr.mxu0 0.0
    %866 = vmatpush1.xpose.msra.mxu0 0.0
    %867 = vmatprep.subr.mxu0 0.0
    %868 = vmatpush1.xpose.msra.mxu0 0.0
    %869 = vmatprep.subr.mxu0 0.0
    %870 = vmatpush1.xpose.msra.mxu0 0.0
    %871 = vmatprep.subr.mxu0 0.0
    %872 = vmatpush1.xpose.msra.mxu0 0.0
    %873 = vmatprep.subr.mxu0 0.0
    %874 = vmatpush1.xpose.msra.mxu0 0.0
    %875 = vmatprep.subr.mxu0 0.0
    %876 = vmatpush1.xpose.msra.mxu0 0.0
    %877 = vmatprep.subr.mxu0 0.0
    %878 = vmatpush1.xpose.msra.mxu0 0.0
    %879 = vmatprep.subr.mxu0 0.0
    %880 = vmatpush1.xpose.msra.mxu0 0.0
    %881 = vmatprep.subr.mxu0 0.0
    %882 = vmatpush1.xpose.msra.mxu0 0.0
    %883 = vmatprep.subr.mxu0 0.0
    %884 = vmatpush1.xpose.msra.mxu0 0.0
    %885 = vmatprep.subr.mxu0 0.0
    %886 = vmatpush1.xpose.msra.mxu0 0.0
    %887 = vmatprep.subr.mxu0 0.0
    %888 = vmatpush1.xpose.msra.mxu0 0.0
    %889 = vmatprep.subr.mxu0 0.0
    %890 = vmatpush1.xpose.msra.mxu0 0.0
    %891 = vmatprep.subr.mxu0 0.0
    %892 = vmatpush1.xpose.msra.mxu0 0.0
    %893 = vmatprep.subr.mxu0 0.0
    %894 = vmatpush1.xpose.msra.mxu0 0.0
    %895 = vmatprep.subr.mxu0 0.0
    %896 = vmatpush1.xpose.msra.mxu0 0.0
    %897 = vmatprep.subr.mxu0 0.0
    %898 = vmatpush1.xpose.msra.mxu0 0.0
    %899 = vmatprep.subr.mxu0 0.0
    %900 = vmatpush1.xpose.msra.mxu0 0.0
    %901 = vmatprep.subr.mxu0 0.0
    %902 = vmatpush1.xpose.msra.mxu0 0.0
    %903 = vmatprep.mubr.f32.mxu0 0.0
    %904 = vmatmul.mubr.f32.gmra.mrb[0].mxu0 %v835
    %v905 = vpop.f32.mrb[0].mxu0
    %v906 = vadd.f32 %v148, %v905
    %v907 = vpop.f32.mrb[0].mxu0
    %908 = vdwg.mxu0
    %909 = vrot.lane.b32.xlu0 %v138, 112
    %v910 = vpop.permute.xlu0 %909
    %911 = vrot.lane.b32.xlu0 %v138, 80
    %v912 = vpop.permute.xlu0 %911
    %v913 = vsel %vm158, %v910, 0
    %v915 = vsel %vm158, %v912, 0
    %917 = vmatprep.subr.mxu0 0.0
    %918 = vmatpush1.xpose.msra.mxu0 %v915
    %919 = vmatprep.subr.mxu0 0.0
    %920 = vmatpush1.xpose.msra.mxu0 0.0
    %921 = vmatprep.subr.mxu0 0.0
    %922 = vmatpush1.xpose.msra.mxu0 0.0
    %923 = vmatprep.subr.mxu0 0.0
    %924 = vmatpush1.xpose.msra.mxu0 0.0
    %925 = vmatprep.subr.mxu0 0.0
    %926 = vmatpush1.xpose.msra.mxu0 0.0
    %927 = vmatprep.subr.mxu0 0.0
    %928 = vmatpush1.xpose.msra.mxu0 0.0
    %929 = vmatprep.subr.mxu0 0.0
    %930 = vmatpush1.xpose.msra.mxu0 0.0
    %931 = vmatprep.subr.mxu0 0.0
    %932 = vmatpush1.xpose.msra.mxu0 0.0
    %933 = vmatprep.subr.mxu0 0.0
    %934 = vmatpush1.xpose.msra.mxu0 0.0
    %935 = vmatprep.subr.mxu0 0.0
    %936 = vmatpush1.xpose.msra.mxu0 0.0
    %937 = vmatprep.subr.mxu0 0.0
    %938 = vmatpush1.xpose.msra.mxu0 0.0
    %939 = vmatprep.subr.mxu0 0.0
    %940 = vmatpush1.xpose.msra.mxu0 0.0
    %941 = vmatprep.subr.mxu0 0.0
    %942 = vmatpush1.xpose.msra.mxu0 0.0
    %943 = vmatprep.subr.mxu0 0.0
    %944 = vmatpush1.xpose.msra.mxu0 0.0
    %945 = vmatprep.subr.mxu0 0.0
    %946 = vmatpush1.xpose.msra.mxu0 0.0
    %947 = vmatprep.subr.mxu0 0.0
    %948 = vmatpush1.xpose.msra.mxu0 0.0
    %949 = vmatprep.subr.mxu0 0.0
    %950 = vmatpush1.xpose.msra.mxu0 0.0
    %951 = vmatprep.subr.mxu0 0.0
    %952 = vmatpush1.xpose.msra.mxu0 0.0
    %953 = vmatprep.subr.mxu0 0.0
    %954 = vmatpush1.xpose.msra.mxu0 0.0
    %955 = vmatprep.subr.mxu0 0.0
    %956 = vmatpush1.xpose.msra.mxu0 0.0
    %957 = vmatprep.subr.mxu0 0.0
    %958 = vmatpush1.xpose.msra.mxu0 0.0
    %959 = vmatprep.subr.mxu0 0.0
    %960 = vmatpush1.xpose.msra.mxu0 0.0
    %961 = vmatprep.subr.mxu0 0.0
    %962 = vmatpush1.xpose.msra.mxu0 0.0
    %963 = vmatprep.subr.mxu0 0.0
    %964 = vmatpush1.xpose.msra.mxu0 0.0
    %965 = vmatprep.subr.mxu0 0.0
    %966 = vmatpush1.xpose.msra.mxu0 0.0
    %967 = vmatprep.subr.mxu0 0.0
    %968 = vmatpush1.xpose.msra.mxu0 0.0
    %969 = vmatprep.subr.mxu0 0.0
    %970 = vmatpush1.xpose.msra.mxu0 0.0
    %971 = vmatprep.subr.mxu0 0.0
    %972 = vmatpush1.xpose.msra.mxu0 0.0
    %973 = vmatprep.subr.mxu0 0.0
    %974 = vmatpush1.xpose.msra.mxu0 0.0
    %975 = vmatprep.subr.mxu0 0.0
    %976 = vmatpush1.xpose.msra.mxu0 0.0
    %977 = vmatprep.subr.mxu0 0.0
    %978 = vmatpush1.xpose.msra.mxu0 0.0
    %979 = vmatprep.subr.mxu0 0.0
    %980 = vmatpush1.xpose.msra.mxu0 0.0
    %981 = vmatprep.mubr.f32.mxu0 0.0
    %982 = vmatmul.mubr.f32.gmra.mrb[0].mxu0 %v913
    %v983 = vpop.f32.mrb[0].mxu0
    %v984 = vadd.f32 %v152, %v983
    %v985 = vpop.f32.mrb[0].mxu0
    %986 = vdwg.mxu0
    %v987 = vsel %vm158, %v906, -inf
    %988 = vmax.xlane.f32.xlu0 %v987
    %v989 = vpop.xlane.xlu0 %988
    %v990 = vsel %vm158, %v984, -inf
    %991 = vmax.xlane.f32.xlu0 %v990
    %v992 = vpop.xlane.xlu0 %991
    %v993 = vsub.f32 %v906, %v989
    %v994 = vsub.f32 %v984, %v992
    %v995 = vmul.f32 %v993, 1.442695
    %v996 = vpow.pop %v995
    %v997 = vmul.f32 %v994, 1.442695
    %v998 = vpow.pop %v997
    %v999 = vsel %vm158, %v996, 0.0
    %1000 = vadd.xlane.f32.xlu0 %v999
    %v1001 = vpop.xlane.xlu0 %1000
    %v1002 = vsel %vm158, %v998, 0.0
    %1003 = vadd.xlane.f32.xlu0 %v1002
    %v1004 = vpop.xlane.xlu0 %1003
    %v1005 = vrcp.pop %v1001
    %v1006 = vmul.f32 1.0, %v1005
    %v1007 = vrcp.pop %v1004
    %v1008 = vmul.f32 1.0, %v1007
    %v1009 = vmul.f32 %v996, %v1006
    %v1010 = vmul.f32 %v998, %v1008
    %1011 = vrot.lane.b32.xlu0 %v133, 48
    %v1012 = vpop.permute.xlu0 %1011
    %v1015 = vsel %vm158, %v1009, 0
    %1017 = vmatprep.subr.mxu0 0.0
    %1018 = vmatpush1.msra.mxu0 %v1012
    %1019 = vmatprep.subr.mxu0 0.0
    %1020 = vmatpush1.msra.mxu0 0.0
    %1021 = vmatprep.subr.mxu0 0.0
    %1022 = vmatpush1.msra.mxu0 0.0
    %1023 = vmatprep.subr.mxu0 0.0
    %1024 = vmatpush1.msra.mxu0 0.0
    %1025 = vmatprep.subr.mxu0 0.0
    %1026 = vmatpush1.msra.mxu0 0.0
    %1027 = vmatprep.subr.mxu0 0.0
    %1028 = vmatpush1.msra.mxu0 0.0
    %1029 = vmatprep.subr.mxu0 0.0
    %1030 = vmatpush1.msra.mxu0 0.0
    %1031 = vmatprep.subr.mxu0 0.0
    %1032 = vmatpush1.msra.mxu0 0.0
    %1033 = vmatprep.subr.mxu0 0.0
    %1034 = vmatpush1.msra.mxu0 0.0
    %1035 = vmatprep.subr.mxu0 0.0
    %1036 = vmatpush1.msra.mxu0 0.0
    %1037 = vmatprep.subr.mxu0 0.0
    %1038 = vmatpush1.msra.mxu0 0.0
    %1039 = vmatprep.subr.mxu0 0.0
    %1040 = vmatpush1.msra.mxu0 0.0
    %1041 = vmatprep.subr.mxu0 0.0
    %1042 = vmatpush1.msra.mxu0 0.0
    %1043 = vmatprep.subr.mxu0 0.0
    %1044 = vmatpush1.msra.mxu0 0.0
    %1045 = vmatprep.subr.mxu0 0.0
    %1046 = vmatpush1.msra.mxu0 0.0
    %1047 = vmatprep.subr.mxu0 0.0
    %1048 = vmatpush1.msra.mxu0 0.0
    %1049 = vmatprep.subr.mxu0 0.0
    %1050 = vmatpush1.msra.mxu0 0.0
    %1051 = vmatprep.subr.mxu0 0.0
    %1052 = vmatpush1.msra.mxu0 0.0
    %1053 = vmatprep.subr.mxu0 0.0
    %1054 = vmatpush1.msra.mxu0 0.0
    %1055 = vmatprep.subr.mxu0 0.0
    %1056 = vmatpush1.msra.mxu0 0.0
    %1057 = vmatprep.subr.mxu0 0.0
    %1058 = vmatpush1.msra.mxu0 0.0
    %1059 = vmatprep.subr.mxu0 0.0
    %1060 = vmatpush1.msra.mxu0 0.0
    %1061 = vmatprep.subr.mxu0 0.0
    %1062 = vmatpush1.msra.mxu0 0.0
    %1063 = vmatprep.subr.mxu0 0.0
    %1064 = vmatpush1.msra.mxu0 0.0
    %1065 = vmatprep.subr.mxu0 0.0
    %1066 = vmatpush1.msra.mxu0 0.0
    %1067 = vmatprep.subr.mxu0 0.0
    %1068 = vmatpush1.msra.mxu0 0.0
    %1069 = vmatprep.subr.mxu0 0.0
    %1070 = vmatpush1.msra.mxu0 0.0
    %1071 = vmatprep.subr.mxu0 0.0
    %1072 = vmatpush1.msra.mxu0 0.0
    %1073 = vmatprep.subr.mxu0 0.0
    %1074 = vmatpush1.msra.mxu0 0.0
    %1075 = vmatprep.subr.mxu0 0.0
    %1076 = vmatpush1.msra.mxu0 0.0
    %1077 = vmatprep.subr.mxu0 0.0
    %1078 = vmatpush1.msra.mxu0 0.0
    %1079 = vmatprep.subr.mxu0 0.0
    %1080 = vmatpush1.msra.mxu0 0.0
    %1081 = vmatprep.mubr.f32.mxu0 0.0
    %1082 = vmatmul.mubr.f32.gmra.mrb[0].mxu0 %v1015
    %v1083 = vpop.f32.mrb[0].mxu0
    %v1084 = vadd.f32 0.0, %v1083
    %v1085 = vpop.f32.mrb[0].mxu0
    %1086 = vdwg.mxu0
    %1087 = vrot.lane.b32.xlu0 %v138, 48
    %v1088 = vpop.permute.xlu0 %1087
    %v1091 = vsel %vm158, %v1010, 0
    %1093 = vmatprep.subr.mxu0 0.0
    %1094 = vmatpush1.msra.mxu0 %v1088
    %1095 = vmatprep.subr.mxu0 0.0
    %1096 = vmatpush1.msra.mxu0 0.0
    %1097 = vmatprep.subr.mxu0 0.0
    %1098 = vmatpush1.msra.mxu0 0.0
    %1099 = vmatprep.subr.mxu0 0.0
    %1100 = vmatpush1.msra.mxu0 0.0
    %1101 = vmatprep.subr.mxu0 0.0
    %1102 = vmatpush1.msra.mxu0 0.0
    %1103 = vmatprep.subr.mxu0 0.0
    %1104 = vmatpush1.msra.mxu0 0.0
    %1105 = vmatprep.subr.mxu0 0.0
    %1106 = vmatpush1.msra.mxu0 0.0
    %1107 = vmatprep.subr.mxu0 0.0
    %1108 = vmatpush1.msra.mxu0 0.0
    %1109 = vmatprep.subr.mxu0 0.0
    %1110 = vmatpush1.msra.mxu0 0.0
    %1111 = vmatprep.subr.mxu0 0.0
    %1112 = vmatpush1.msra.mxu0 0.0
    %1113 = vmatprep.subr.mxu0 0.0
    %1114 = vmatpush1.msra.mxu0 0.0
    %1115 = vmatprep.subr.mxu0 0.0
    %1116 = vmatpush1.msra.mxu0 0.0
    %1117 = vmatprep.subr.mxu0 0.0
    %1118 = vmatpush1.msra.mxu0 0.0
    %1119 = vmatprep.subr.mxu0 0.0
    %1120 = vmatpush1.msra.mxu0 0.0
    %1121 = vmatprep.subr.mxu0 0.0
    %1122 = vmatpush1.msra.mxu0 0.0
    %1123 = vmatprep.subr.mxu0 0.0
    %1124 = vmatpush1.msra.mxu0 0.0
    %1125 = vmatprep.subr.mxu0 0.0
    %1126 = vmatpush1.msra.mxu0 0.0
    %1127 = vmatprep.subr.mxu0 0.0
    %1128 = vmatpush1.msra.mxu0 0.0
    %1129 = vmatprep.subr.mxu0 0.0
    %1130 = vmatpush1.msra.mxu0 0.0
    %1131 = vmatprep.subr.mxu0 0.0
    %1132 = vmatpush1.msra.mxu0 0.0
    %1133 = vmatprep.subr.mxu0 0.0
    %1134 = vmatpush1.msra.mxu0 0.0
    %1135 = vmatprep.subr.mxu0 0.0
    %1136 = vmatpush1.msra.mxu0 0.0
    %1137 = vmatprep.subr.mxu0 0.0
    %1138 = vmatpush1.msra.mxu0 0.0
    %1139 = vmatprep.subr.mxu0 0.0
    %1140 = vmatpush1.msra.mxu0 0.0
    %1141 = vmatprep.subr.mxu0 0.0
    %1142 = vmatpush1.msra.mxu0 0.0
    %1143 = vmatprep.subr.mxu0 0.0
    %1144 = vmatpush1.msra.mxu0 0.0
    %1145 = vmatprep.subr.mxu0 0.0
    %1146 = vmatpush1.msra.mxu0 0.0
    %1147 = vmatprep.subr.mxu0 0.0
    %1148 = vmatpush1.msra.mxu0 0.0
    %1149 = vmatprep.subr.mxu0 0.0
    %1150 = vmatpush1.msra.mxu0 0.0
    %1151 = vmatprep.subr.mxu0 0.0
    %1152 = vmatpush1.msra.mxu0 0.0
    %1153 = vmatprep.subr.mxu0 0.0
    %1154 = vmatpush1.msra.mxu0 0.0
    %1155 = vmatprep.subr.mxu0 0.0
    %1156 = vmatpush1.msra.mxu0 0.0
    %1157 = vmatprep.mubr.f32.mxu0 0.0
    %1158 = vmatmul.mubr.f32.gmra.mrb[0].mxu0 %v1091
    %v1159 = vpop.f32.mrb[0].mxu0
    %v1160 = vadd.f32 0.0, %v1159
    %v1161 = vpop.f32.mrb[0].mxu0
    %1162 = vdwg.mxu0
    %1165 = vrot.lane.b32.xlu0 %v1084, 16
    %v1166 = vpop.permute.xlu0 %1165
    %1167 = vrot.lane.b32.xlu0 %v1160, 16
    %v1168 = vpop.permute.xlu0 %1167
    %vm1171 = vcmask 195712
    %1172 = vst.msk [vmem:[#allocation7] sm:$0xff] %vm1171, %v1166
    %1173 = vst.msk [vmem:[#allocation7 + $0x8] sm:$0xff] %vm1171, %v1168
    %1174 = vrot.lane.b32.xlu0 %v133, 104
    %v1175 = vpop.permute.xlu0 %1174
    %1176 = vrot.lane.b32.xlu0 %v133, 72
    %v1177 = vpop.permute.xlu0 %1176
    %v1178 = vsel %vm158, %v1175, 0
    %v1180 = vsel %vm158, %v1177, 0
    %1182 = vmatprep.subr.mxu0 0.0
    %1183 = vmatpush1.xpose.msra.mxu0 %v1180
    %1184 = vmatprep.subr.mxu0 0.0
    %1185 = vmatpush1.xpose.msra.mxu0 0.0
    %1186 = vmatprep.subr.mxu0 0.0
    %1187 = vmatpush1.xpose.msra.mxu0 0.0
    %1188 = vmatprep.subr.mxu0 0.0
    %1189 = vmatpush1.xpose.msra.mxu0 0.0
    %1190 = vmatprep.subr.mxu0 0.0
    %1191 = vmatpush1.xpose.msra.mxu0 0.0
    %1192 = vmatprep.subr.mxu0 0.0
    %1193 = vmatpush1.xpose.msra.mxu0 0.0
    %1194 = vmatprep.subr.mxu0 0.0
    %1195 = vmatpush1.xpose.msra.mxu0 0.0
    %1196 = vmatprep.subr.mxu0 0.0
    %1197 = vmatpush1.xpose.msra.mxu0 0.0
    %1198 = vmatprep.subr.mxu0 0.0
    %1199 = vmatpush1.xpose.msra.mxu0 0.0
    %1200 = vmatprep.subr.mxu0 0.0
    %1201 = vmatpush1.xpose.msra.mxu0 0.0
    %1202 = vmatprep.subr.mxu0 0.0
    %1203 = vmatpush1.xpose.msra.mxu0 0.0
    %1204 = vmatprep.subr.mxu0 0.0
    %1205 = vmatpush1.xpose.msra.mxu0 0.0
    %1206 = vmatprep.subr.mxu0 0.0
    %1207 = vmatpush1.xpose.msra.mxu0 0.0
    %1208 = vmatprep.subr.mxu0 0.0
    %1209 = vmatpush1.xpose.msra.mxu0 0.0
    %1210 = vmatprep.subr.mxu0 0.0
    %1211 = vmatpush1.xpose.msra.mxu0 0.0
    %1212 = vmatprep.subr.mxu0 0.0
    %1213 = vmatpush1.xpose.msra.mxu0 0.0
    %1214 = vmatprep.subr.mxu0 0.0
    %1215 = vmatpush1.xpose.msra.mxu0 0.0
    %1216 = vmatprep.subr.mxu0 0.0
    %1217 = vmatpush1.xpose.msra.mxu0 0.0
    %1218 = vmatprep.subr.mxu0 0.0
    %1219 = vmatpush1.xpose.msra.mxu0 0.0
    %1220 = vmatprep.subr.mxu0 0.0
    %1221 = vmatpush1.xpose.msra.mxu0 0.0
    %1222 = vmatprep.subr.mxu0 0.0
    %1223 = vmatpush1.xpose.msra.mxu0 0.0
    %1224 = vmatprep.subr.mxu0 0.0
    %1225 = vmatpush1.xpose.msra.mxu0 0.0
    %1226 = vmatprep.subr.mxu0 0.0
    %1227 = vmatpush1.xpose.msra.mxu0 0.0
    %1228 = vmatprep.subr.mxu0 0.0
    %1229 = vmatpush1.xpose.msra.mxu0 0.0
    %1230 = vmatprep.subr.mxu0 0.0
    %1231 = vmatpush1.xpose.msra.mxu0 0.0
    %1232 = vmatprep.subr.mxu0 0.0
    %1233 = vmatpush1.xpose.msra.mxu0 0.0
    %1234 = vmatprep.subr.mxu0 0.0
    %1235 = vmatpush1.xpose.msra.mxu0 0.0
    %1236 = vmatprep.subr.mxu0 0.0
    %1237 = vmatpush1.xpose.msra.mxu0 0.0
    %1238 = vmatprep.subr.mxu0 0.0
    %1239 = vmatpush1.xpose.msra.mxu0 0.0
    %1240 = vmatprep.subr.mxu0 0.0
    %1241 = vmatpush1.xpose.msra.mxu0 0.0
    %1242 = vmatprep.subr.mxu0 0.0
    %1243 = vmatpush1.xpose.msra.mxu0 0.0
    %1244 = vmatprep.subr.mxu0 0.0
    %1245 = vmatpush1.xpose.msra.mxu0 0.0
    %1246 = vmatprep.mubr.f32.mxu0 0.0
    %1247 = vmatmul.mubr.f32.gmra.mrb[0].mxu0 %v1178
    %v1248 = vpop.f32.mrb[0].mxu0
    %v1249 = vadd.f32 %v148, %v1248
    %v1250 = vpop.f32.mrb[0].mxu0
    %1251 = vdwg.mxu0
    %1252 = vrot.lane.b32.xlu0 %v138, 104
    %v1253 = vpop.permute.xlu0 %1252
    %1254 = vrot.lane.b32.xlu0 %v138, 72
    %v1255 = vpop.permute.xlu0 %1254
    %v1256 = vsel %vm158, %v1253, 0
    %v1258 = vsel %vm158, %v1255, 0
    %1260 = vmatprep.subr.mxu0 0.0
    %1261 = vmatpush1.xpose.msra.mxu0 %v1258
    %1262 = vmatprep.subr.mxu0 0.0
    %1263 = vmatpush1.xpose.msra.mxu0 0.0
    %1264 = vmatprep.subr.mxu0 0.0
    %1265 = vmatpush1.xpose.msra.mxu0 0.0
    %1266 = vmatprep.subr.mxu0 0.0
    %1267 = vmatpush1.xpose.msra.mxu0 0.0
    %1268 = vmatprep.subr.mxu0 0.0
    %1269 = vmatpush1.xpose.msra.mxu0 0.0
    %1270 = vmatprep.subr.mxu0 0.0
    %1271 = vmatpush1.xpose.msra.mxu0 0.0
    %1272 = vmatprep.subr.mxu0 0.0
    %1273 = vmatpush1.xpose.msra.mxu0 0.0
    %1274 = vmatprep.subr.mxu0 0.0
    %1275 = vmatpush1.xpose.msra.mxu0 0.0
    %1276 = vmatprep.subr.mxu0 0.0
    %1277 = vmatpush1.xpose.msra.mxu0 0.0
    %1278 = vmatprep.subr.mxu0 0.0
    %1279 = vmatpush1.xpose.msra.mxu0 0.0
    %1280 = vmatprep.subr.mxu0 0.0
    %1281 = vmatpush1.xpose.msra.mxu0 0.0
    %1282 = vmatprep.subr.mxu0 0.0
    %1283 = vmatpush1.xpose.msra.mxu0 0.0
    %1284 = vmatprep.subr.mxu0 0.0
    %1285 = vmatpush1.xpose.msra.mxu0 0.0
    %1286 = vmatprep.subr.mxu0 0.0
    %1287 = vmatpush1.xpose.msra.mxu0 0.0
    %1288 = vmatprep.subr.mxu0 0.0
    %1289 = vmatpush1.xpose.msra.mxu0 0.0
    %1290 = vmatprep.subr.mxu0 0.0
    %1291 = vmatpush1.xpose.msra.mxu0 0.0
    %1292 = vmatprep.subr.mxu0 0.0
    %1293 = vmatpush1.xpose.msra.mxu0 0.0
    %1294 = vmatprep.subr.mxu0 0.0
    %1295 = vmatpush1.xpose.msra.mxu0 0.0
    %1296 = vmatprep.subr.mxu0 0.0
    %1297 = vmatpush1.xpose.msra.mxu0 0.0
    %1298 = vmatprep.subr.mxu0 0.0
    %1299 = vmatpush1.xpose.msra.mxu0 0.0
    %1300 = vmatprep.subr.mxu0 0.0
    %1301 = vmatpush1.xpose.msra.mxu0 0.0
    %1302 = vmatprep.subr.mxu0 0.0
    %1303 = vmatpush1.xpose.msra.mxu0 0.0
    %1304 = vmatprep.subr.mxu0 0.0
    %1305 = vmatpush1.xpose.msra.mxu0 0.0
    %1306 = vmatprep.subr.mxu0 0.0
    %1307 = vmatpush1.xpose.msra.mxu0 0.0
    %1308 = vmatprep.subr.mxu0 0.0
    %1309 = vmatpush1.xpose.msra.mxu0 0.0
    %1310 = vmatprep.subr.mxu0 0.0
    %1311 = vmatpush1.xpose.msra.mxu0 0.0
    %1312 = vmatprep.subr.mxu0 0.0
    %1313 = vmatpush1.xpose.msra.mxu0 0.0
    %1314 = vmatprep.subr.mxu0 0.0
    %1315 = vmatpush1.xpose.msra.mxu0 0.0
    %1316 = vmatprep.subr.mxu0 0.0
    %1317 = vmatpush1.xpose.msra.mxu0 0.0
    %1318 = vmatprep.subr.mxu0 0.0
    %1319 = vmatpush1.xpose.msra.mxu0 0.0
    %1320 = vmatprep.subr.mxu0 0.0
    %1321 = vmatpush1.xpose.msra.mxu0 0.0
    %1322 = vmatprep.subr.mxu0 0.0
    %1323 = vmatpush1.xpose.msra.mxu0 0.0
    %1324 = vmatprep.mubr.f32.mxu0 0.0
    %1325 = vmatmul.mubr.f32.gmra.mrb[0].mxu0 %v1256
    %v1326 = vpop.f32.mrb[0].mxu0
    %v1327 = vadd.f32 %v152, %v1326
    %v1328 = vpop.f32.mrb[0].mxu0
    %1329 = vdwg.mxu0
    %v1330 = vsel %vm158, %v1249, -inf
    %1331 = vmax.xlane.f32.xlu0 %v1330
    %v1332 = vpop.xlane.xlu0 %1331
    %v1333 = vsel %vm158, %v1327, -inf
    %1334 = vmax.xlane.f32.xlu0 %v1333
    %v1335 = vpop.xlane.xlu0 %1334
    %v1336 = vsub.f32 %v1249, %v1332
    %v1337 = vsub.f32 %v1327, %v1335
    %v1338 = vmul.f32 %v1336, 1.442695
    %v1339 = vpow.pop %v1338
    %v1340 = vmul.f32 %v1337, 1.442695
    %v1341 = vpow.pop %v1340
    %v1342 = vsel %vm158, %v1339, 0.0
    %1343 = vadd.xlane.f32.xlu0 %v1342
    %v1344 = vpop.xlane.xlu0 %1343
    %v1345 = vsel %vm158, %v1341, 0.0
    %1346 = vadd.xlane.f32.xlu0 %v1345
    %v1347 = vpop.xlane.xlu0 %1346
    %v1348 = vrcp.pop %v1344
    %v1349 = vmul.f32 1.0, %v1348
    %v1350 = vrcp.pop %v1347
    %v1351 = vmul.f32 1.0, %v1350
    %v1352 = vmul.f32 %v1339, %v1349
    %v1353 = vmul.f32 %v1341, %v1351
    %1354 = vrot.lane.b32.xlu0 %v133, 40
    %v1355 = vpop.permute.xlu0 %1354
    %v1358 = vsel %vm158, %v1352, 0
    %1360 = vmatprep.subr.mxu0 0.0
    %1361 = vmatpush1.msra.mxu0 %v1355
    %1362 = vmatprep.subr.mxu0 0.0
    %1363 = vmatpush1.msra.mxu0 0.0
    %1364 = vmatprep.subr.mxu0 0.0
    %1365 = vmatpush1.msra.mxu0 0.0
    %1366 = vmatprep.subr.mxu0 0.0
    %1367 = vmatpush1.msra.mxu0 0.0
    %1368 = vmatprep.subr.mxu0 0.0
    %1369 = vmatpush1.msra.mxu0 0.0
    %1370 = vmatprep.subr.mxu0 0.0
    %1371 = vmatpush1.msra.mxu0 0.0
    %1372 = vmatprep.subr.mxu0 0.0
    %1373 = vmatpush1.msra.mxu0 0.0
    %1374 = vmatprep.subr.mxu0 0.0
    %1375 = vmatpush1.msra.mxu0 0.0
    %1376 = vmatprep.subr.mxu0 0.0
    %1377 = vmatpush1.msra.mxu0 0.0
    %1378 = vmatprep.subr.mxu0 0.0
    %1379 = vmatpush1.msra.mxu0 0.0
    %1380 = vmatprep.subr.mxu0 0.0
    %1381 = vmatpush1.msra.mxu0 0.0
    %1382 = vmatprep.subr.mxu0 0.0
    %1383 = vmatpush1.msra.mxu0 0.0
    %1384 = vmatprep.subr.mxu0 0.0
    %1385 = vmatpush1.msra.mxu0 0.0
    %1386 = vmatprep.subr.mxu0 0.0
    %1387 = vmatpush1.msra.mxu0 0.0
    %1388 = vmatprep.subr.mxu0 0.0
    %1389 = vmatpush1.msra.mxu0 0.0
    %1390 = vmatprep.subr.mxu0 0.0
    %1391 = vmatpush1.msra.mxu0 0.0
    %1392 = vmatprep.subr.mxu0 0.0
    %1393 = vmatpush1.msra.mxu0 0.0
    %1394 = vmatprep.subr.mxu0 0.0
    %1395 = vmatpush1.msra.mxu0 0.0
    %1396 = vmatprep.subr.mxu0 0.0
    %1397 = vmatpush1.msra.mxu0 0.0
    %1398 = vmatprep.subr.mxu0 0.0
    %1399 = vmatpush1.msra.mxu0 0.0
    %1400 = vmatprep.subr.mxu0 0.0
    %1401 = vmatpush1.msra.mxu0 0.0
    %1402 = vmatprep.subr.mxu0 0.0
    %1403 = vmatpush1.msra.mxu0 0.0
    %1404 = vmatprep.subr.mxu0 0.0
    %1405 = vmatpush1.msra.mxu0 0.0
    %1406 = vmatprep.subr.mxu0 0.0
    %1407 = vmatpush1.msra.mxu0 0.0
    %1408 = vmatprep.subr.mxu0 0.0
    %1409 = vmatpush1.msra.mxu0 0.0
    %1410 = vmatprep.subr.mxu0 0.0
    %1411 = vmatpush1.msra.mxu0 0.0
    %1412 = vmatprep.subr.mxu0 0.0
    %1413 = vmatpush1.msra.mxu0 0.0
    %1414 = vmatprep.subr.mxu0 0.0
    %1415 = vmatpush1.msra.mxu0 0.0
    %1416 = vmatprep.subr.mxu0 0.0
    %1417 = vmatpush1.msra.mxu0 0.0
    %1418 = vmatprep.subr.mxu0 0.0
    %1419 = vmatpush1.msra.mxu0 0.0
    %1420 = vmatprep.subr.mxu0 0.0
    %1421 = vmatpush1.msra.mxu0 0.0
    %1422 = vmatprep.subr.mxu0 0.0
    %1423 = vmatpush1.msra.mxu0 0.0
    %1424 = vmatprep.mubr.f32.mxu0 0.0
    %1425 = vmatmul.mubr.f32.gmra.mrb[0].mxu0 %v1358
    %v1426 = vpop.f32.mrb[0].mxu0
    %v1427 = vadd.f32 0.0, %v1426
    %v1428 = vpop.f32.mrb[0].mxu0
    %1429 = vdwg.mxu0
    %1430 = vrot.lane.b32.xlu0 %v138, 40
    %v1431 = vpop.permute.xlu0 %1430
    %v1434 = vsel %vm158, %v1353, 0
    %1436 = vmatprep.subr.mxu0 0.0
    %1437 = vmatpush1.msra.mxu0 %v1431
    %1438 = vmatprep.subr.mxu0 0.0
    %1439 = vmatpush1.msra.mxu0 0.0
    %1440 = vmatprep.subr.mxu0 0.0
    %1441 = vmatpush1.msra.mxu0 0.0
    %1442 = vmatprep.subr.mxu0 0.0
    %1443 = vmatpush1.msra.mxu0 0.0
    %1444 = vmatprep.subr.mxu0 0.0
    %1445 = vmatpush1.msra.mxu0 0.0
    %1446 = vmatprep.subr.mxu0 0.0
    %1447 = vmatpush1.msra.mxu0 0.0
    %1448 = vmatprep.subr.mxu0 0.0
    %1449 = vmatpush1.msra.mxu0 0.0
    %1450 = vmatprep.subr.mxu0 0.0
    %1451 = vmatpush1.msra.mxu0 0.0
    %1452 = vmatprep.subr.mxu0 0.0
    %1453 = vmatpush1.msra.mxu0 0.0
    %1454 = vmatprep.subr.mxu0 0.0
    %1455 = vmatpush1.msra.mxu0 0.0
    %1456 = vmatprep.subr.mxu0 0.0
    %1457 = vmatpush1.msra.mxu0 0.0
    %1458 = vmatprep.subr.mxu0 0.0
    %1459 = vmatpush1.msra.mxu0 0.0
    %1460 = vmatprep.subr.mxu0 0.0
    %1461 = vmatpush1.msra.mxu0 0.0
    %1462 = vmatprep.subr.mxu0 0.0
    %1463 = vmatpush1.msra.mxu0 0.0
    %1464 = vmatprep.subr.mxu0 0.0
    %1465 = vmatpush1.msra.mxu0 0.0
    %1466 = vmatprep.subr.mxu0 0.0
    %1467 = vmatpush1.msra.mxu0 0.0
    %1468 = vmatprep.subr.mxu0 0.0
    %1469 = vmatpush1.msra.mxu0 0.0
    %1470 = vmatprep.subr.mxu0 0.0
    %1471 = vmatpush1.msra.mxu0 0.0
    %1472 = vmatprep.subr.mxu0 0.0
    %1473 = vmatpush1.msra.mxu0 0.0
    %1474 = vmatprep.subr.mxu0 0.0
    %1475 = vmatpush1.msra.mxu0 0.0
    %1476 = vmatprep.subr.mxu0 0.0
    %1477 = vmatpush1.msra.mxu0 0.0
    %1478 = vmatprep.subr.mxu0 0.0
    %1479 = vmatpush1.msra.mxu0 0.0
    %1480 = vmatprep.subr.mxu0 0.0
    %1481 = vmatpush1.msra.mxu0 0.0
    %1482 = vmatprep.subr.mxu0 0.0
    %1483 = vmatpush1.msra.mxu0 0.0
    %1484 = vmatprep.subr.mxu0 0.0
    %1485 = vmatpush1.msra.mxu0 0.0
    %1486 = vmatprep.subr.mxu0 0.0
    %1487 = vmatpush1.msra.mxu0 0.0
    %1488 = vmatprep.subr.mxu0 0.0
    %1489 = vmatpush1.msra.mxu0 0.0
    %1490 = vmatprep.subr.mxu0 0.0
    %1491 = vmatpush1.msra.mxu0 0.0
    %1492 = vmatprep.subr.mxu0 0.0
    %1493 = vmatpush1.msra.mxu0 0.0
    %1494 = vmatprep.subr.mxu0 0.0
    %1495 = vmatpush1.msra.mxu0 0.0
    %1496 = vmatprep.subr.mxu0 0.0
    %1497 = vmatpush1.msra.mxu0 0.0
    %1498 = vmatprep.subr.mxu0 0.0
    %1499 = vmatpush1.msra.mxu0 0.0
    %1500 = vmatprep.mubr.f32.mxu0 0.0
    %1501 = vmatmul.mubr.f32.gmra.mrb[0].mxu0 %v1434
    %v1502 = vpop.f32.mrb[0].mxu0
    %v1503 = vadd.f32 0.0, %v1502
    %v1504 = vpop.f32.mrb[0].mxu0
    %1505 = vdwg.mxu0
    %1508 = vrot.lane.b32.xlu0 %v1427, 24
    %v1509 = vpop.permute.xlu0 %1508
    %1510 = vrot.lane.b32.xlu0 %v1503, 24
    %v1511 = vpop.permute.xlu0 %1510
    %vm1514 = vcmask 261312
    %1515 = vst.msk [vmem:[#allocation7] sm:$0xff] %vm1514, %v1509
    %1516 = vst.msk [vmem:[#allocation7 + $0x8] sm:$0xff] %vm1514, %v1511
    // Predicated region
    $region26: #{tpu_custom_call.1} parent=1 // pred_check
      _
    $region27: #{tpu_custom_call.1} parent=1 // pred_check_branch
      %1518 = sbr.rel (0) target = $region29
    $region28: #{tpu_custom_call.1} parent=1 // pred_region
      %s1520 = ssub.s32 256, 256
      %1521 = vsyncadd [#allocation4], %s1520
      %s1522 = sshll.u32 [#allocation7], 4
      %s1523 = int_to_ptr.vmem [resolvable:$true] %s1522
      %1528 = dma.vmem_to_hbm [thread:$0]  %s1523, 256, %s4, [#allocation4], 128, 128, 8
    $region29: #{tpu_custom_call.1} parent=1 // pred_fallthru
      _
    // Predicated region
    $region30: #{tpu_custom_call.1} parent=1 // pred_check
      _
    $region31: #{tpu_custom_call.1} parent=1 // pred_check_branch
      %1530 = sbr.rel (0) target = $region33
    $region32: #{tpu_custom_call.1} parent=1 // pred_region
      %1531 = dma.done [#allocation4], 256
    $region33: #{tpu_custom_call.1} parent=1 // pred_fallthru
      _
    %1532 = vsyncpa [#allocation3], 1
    %1533 = vsyncpa [#allocation6], 1
    %1534 = vsyncpa [#allocation4], 1

</llo_original>
